<compile_context>
chip_gen: v7x
topology: tpu7x:2x2x1
jax: 0.10.0
libtpu: 0.0.40
codegen_flags: <defaults>
</compile_context>

<pallas_src>
import jax
import jax.numpy as jnp
from jax.experimental import pallas as pl
from jax.experimental.pallas import tpu as pltpu


def mlp_kernel(x_ref,
               w1_ref, b1_ref,
               w2_ref, b2_ref,
               w3_ref, b3_ref,
               w4_ref, b4_ref,
               o_ref):
    # Whole forward pass for one batch tile; all operands resident in VMEM.
    # Weights are bf16 [in, out] (real widths, no padding); biases are f32.
    # Matmuls accumulate in f32 on the MXU; ReLUs run on the VPU.
    x = x_ref[...].astype(jnp.bfloat16)          # in-kernel cast, (tile, F)

    h = jnp.dot(x, w1_ref[...], preferred_element_type=jnp.float32) + b1_ref[...]
    h = jnp.maximum(h, 0.0).astype(jnp.bfloat16)                     # (tile, 128)

    h = jnp.dot(h, w2_ref[...], preferred_element_type=jnp.float32) + b2_ref[...]
    h = jnp.maximum(h, 0.0).astype(jnp.bfloat16)                     # (tile, 64)

    h = jnp.dot(h, w3_ref[...], preferred_element_type=jnp.float32) + b3_ref[...]
    h = jnp.maximum(h, 0.0).astype(jnp.bfloat16)                     # (tile, 32)

    h = jnp.dot(h, w4_ref[...], preferred_element_type=jnp.float32) + b4_ref[...]

    # Narrow store: 1 real output column only (block last dim == full dim).
    o_ref[...] = h.astype(o_ref.dtype)                               # (tile, 1)


def _round_up(n, m):
    return ((n + m - 1) // m) * m


def prepare_params(params):
    """One-time (hoisted out of the per-call path) dtype preparation:
    bf16 weights (native MXU operand dtype), f32 biases. No padding."""
    return (
        params["w1"].astype(jnp.bfloat16), params["b1"].astype(jnp.float32),
        params["w2"].astype(jnp.bfloat16), params["b2"].astype(jnp.float32),
        params["w3"].astype(jnp.bfloat16), params["b3"].astype(jnp.float32),
        params["w4"].astype(jnp.bfloat16), params["b4"].astype(jnp.float32),
    )


def neural_net_forward(x, kernel_params, *, batch_tile=1024):
    """x: [N, F] float32. kernel_params: tuple from prepare_params().
    Returns [N, 1] float32."""
    n, f = x.shape
    w1, b1, w2, b2, w3, b3, w4, b4 = kernel_params

    # Tile choice: multiple of 256 for long contiguous DMAs / amortized step
    # overhead, but capped at ~ceil(N/2) so a megacore part (v7x) still gets
    # >=2 grid steps, and never (needlessly) larger than the 8-rounded batch.
    tile = min(batch_tile, max(256, _round_up(pl.cdiv(n, 2), 256)))
    tile = max(8, min(tile, _round_up(n, 8)))
    grid = (pl.cdiv(n, tile),)

    def bcast(shape):
        nd = len(shape)
        return pl.BlockSpec(shape, lambda i: (0,) * nd)

    out = pl.pallas_call(
        mlp_kernel,
        out_shape=jax.ShapeDtypeStruct((n, 1), jnp.float32),
        grid_spec=pltpu.PrefetchScalarGridSpec(
            num_scalar_prefetch=0,
            grid=grid,
            in_specs=[
                pl.BlockSpec((tile, f), lambda i: (i, 0)),
                bcast(w1.shape), bcast(b1.shape),
                bcast(w2.shape), bcast(b2.shape),
                bcast(w3.shape), bcast(b3.shape),
                bcast(w4.shape), bcast(b4.shape),
            ],
            out_specs=pl.BlockSpec((tile, 1), lambda i: (i, 0)),
        ),
        compiler_params=pltpu.CompilerParams(
            dimension_semantics=("parallel",)),
    )(x, w1, b1, w2, b2, w3, b3, w4, b4)

    return out


def init_params(key, input_size):
    """Deterministic synthetic parameters, PyTorch Linear-style uniform init.
    Weights are stored transposed: [in, out]."""
    sizes = [(input_size, 128), (128, 64), (64, 32), (32, 1)]
    params = {}
    for idx, (fan_in, fan_out) in enumerate(sizes, start=1):
        key, kw, kb = jax.random.split(key, 3)
        bound = 1.0 / jnp.sqrt(fan_in)
        params[f"w{idx}"] = jax.random.uniform(
            kw, (fan_in, fan_out), jnp.float32, -bound, bound)
        params[f"b{idx}"] = jax.random.uniform(
            kb, (1, fan_out), jnp.float32, -bound, bound)
    return params


def reference_forward_f32(x, params):
    h = jnp.maximum(x @ params["w1"] + params["b1"], 0.0)
    h = jnp.maximum(h @ params["w2"] + params["b2"], 0.0)
    h = jnp.maximum(h @ params["w3"] + params["b3"], 0.0)
    return h @ params["w4"] + params["b4"]


def reference_forward_bf16(x, params):
    """Same bf16-operand / f32-accumulate math as the kernel."""
    def mm(a, w):
        return jnp.dot(a.astype(jnp.bfloat16), w.astype(jnp.bfloat16),
                       preferred_element_type=jnp.float32)
    h = jnp.maximum(mm(x, params["w1"]) + params["b1"], 0.0)
    h = jnp.maximum(mm(h, params["w2"]) + params["b2"], 0.0)
    h = jnp.maximum(mm(h, params["w3"]) + params["b3"], 0.0)
    return mm(h, params["w4"]) + params["b4"]


if __name__ == "__main__":
    key = jax.random.PRNGKey(0)
    # Small tabular shapes consistent with the module; batch is NOT a multiple
    # of the tile (exercises the cdiv / partial-last-block path) and yields
    # 2 grid steps so a second TensorCore (v7x) gets work.
    batch, input_size = 384, 16

    key, kx = jax.random.split(key)
    x = jax.random.normal(kx, (batch, input_size), jnp.float32)
    params = init_params(key, input_size)
    kernel_params = prepare_params(params)   # hoisted: once per model, not per call

    out = neural_net_forward(x, kernel_params, batch_tile=1024)
    out = jax.block_until_ready(out)
    assert out.shape == (batch, 1)

    # Tight check vs a reference using identical bf16-operand math.
    ref_bf16 = reference_forward_bf16(x, params)
    assert jnp.allclose(out, ref_bf16, atol=2e-3, rtol=2e-3), \
        "mismatch vs bf16 JAX reference"

    # Loose sanity check vs the full-f32 reference (bf16 quantization noise).
    ref_f32 = reference_forward_f32(x, params)
    assert jnp.allclose(out, ref_f32, atol=5e-2, rtol=5e-2), \
        "mismatch vs f32 JAX reference"

    print("KERNEL_OK")
</pallas_src>

<mosaic_0001>
module attributes {stable_mosaic.version = 11 : i64} {
  func.func @mlp_kernel(%arg0: i32, %arg1: memref<256x16xf32, #tpu.memory_space<vmem>>, %arg2: memref<16x128xbf16, #tpu.memory_space<vmem>>, %arg3: memref<1x128xf32, #tpu.memory_space<vmem>>, %arg4: memref<128x64xbf16, #tpu.memory_space<vmem>>, %arg5: memref<1x64xf32, #tpu.memory_space<vmem>>, %arg6: memref<64x32xbf16, #tpu.memory_space<vmem>>, %arg7: memref<1x32xf32, #tpu.memory_space<vmem>>, %arg8: memref<32x1xbf16, #tpu.memory_space<vmem>>, %arg9: memref<1x1xf32, #tpu.memory_space<vmem>>, %arg10: memref<256x1xf32, #tpu.memory_space<vmem>>) attributes {dimension_semantics = [#tpu.dimension_semantics<parallel>], iteration_bounds = array<i64: 2>, scalar_prefetch = 0 : i64, scratch_operands = 0 : i64, tpu.core_type = #tpu.core_type<tc>, window_params = [{transform_indices = @transform_0, window_bounds = array<i64: 256, 16>}, {pipeline_mode = #tpu.pipeline_mode<synchronous>, transform_indices = @transform_1, window_bounds = array<i64: 16, 128>}, {pipeline_mode = #tpu.pipeline_mode<synchronous>, transform_indices = @transform_2, window_bounds = array<i64: 1, 128>}, {pipeline_mode = #tpu.pipeline_mode<synchronous>, transform_indices = @transform_3, window_bounds = array<i64: 128, 64>}, {pipeline_mode = #tpu.pipeline_mode<synchronous>, transform_indices = @transform_4, window_bounds = array<i64: 1, 64>}, {pipeline_mode = #tpu.pipeline_mode<synchronous>, transform_indices = @transform_5, window_bounds = array<i64: 64, 32>}, {pipeline_mode = #tpu.pipeline_mode<synchronous>, transform_indices = @transform_6, window_bounds = array<i64: 1, 32>}, {pipeline_mode = #tpu.pipeline_mode<synchronous>, transform_indices = @transform_7, window_bounds = array<i64: 32, 1>}, {pipeline_mode = #tpu.pipeline_mode<synchronous>, transform_indices = @transform_8, window_bounds = array<i64: 1, 1>}, {transform_indices = @transform_9, window_bounds = array<i64: 256, 1>}]} {
    %c0 = arith.constant 0 : index
    %c0_0 = arith.constant 0 : index
    %0 = vector.load %arg1[%c0, %c0_0] : memref<256x16xf32, #tpu.memory_space<vmem>>, vector<256x16xf32>
    %1 = arith.truncf %0 : vector<256x16xf32> to vector<256x16xbf16>
    %c0_1 = arith.constant 0 : index
    %c0_2 = arith.constant 0 : index
    %2 = vector.load %arg2[%c0_1, %c0_2] : memref<16x128xbf16, #tpu.memory_space<vmem>>, vector<16x128xbf16>
    %cst = arith.constant dense<0.000000e+00> : vector<256x128xf32>
    %3 = tpu.matmul %1, %2, %cst {dimension_numbers = #tpu.dot_dimension_numbers<[1], [0], [0], [1], [0, 0, 1, 1], [], []>} : vector<256x16xbf16>, vector<16x128xbf16>, vector<256x128xf32> -> vector<256x128xf32>
    %c0_3 = arith.constant 0 : index
    %c0_4 = arith.constant 0 : index
    %4 = vector.load %arg3[%c0_3, %c0_4] : memref<1x128xf32, #tpu.memory_space<vmem>>, vector<1x128xf32>
    %5 = vector.broadcast %4 : vector<1x128xf32> to vector<256x128xf32>
    %6 = arith.addf %3, %5 : vector<256x128xf32>
    %cst_5 = arith.constant 0.000000e+00 : f32
    %7 = vector.broadcast %cst_5 : f32 to vector<256x128xf32>
    %8 = arith.maximumf %6, %7 : vector<256x128xf32>
    %9 = arith.truncf %8 : vector<256x128xf32> to vector<256x128xbf16>
    %c0_6 = arith.constant 0 : index
    %c0_7 = arith.constant 0 : index
    %10 = vector.load %arg4[%c0_6, %c0_7] : memref<128x64xbf16, #tpu.memory_space<vmem>>, vector<128x64xbf16>
    %cst_8 = arith.constant dense<0.000000e+00> : vector<256x64xf32>
    %11 = tpu.matmul %9, %10, %cst_8 {dimension_numbers = #tpu.dot_dimension_numbers<[1], [0], [0], [1], [0, 0, 1, 1], [], []>} : vector<256x128xbf16>, vector<128x64xbf16>, vector<256x64xf32> -> vector<256x64xf32>
    %c0_9 = arith.constant 0 : index
    %c0_10 = arith.constant 0 : index
    %12 = vector.load %arg5[%c0_9, %c0_10] : memref<1x64xf32, #tpu.memory_space<vmem>>, vector<1x64xf32>
    %13 = vector.broadcast %12 : vector<1x64xf32> to vector<256x64xf32>
    %14 = arith.addf %11, %13 : vector<256x64xf32>
    %cst_11 = arith.constant 0.000000e+00 : f32
    %15 = vector.broadcast %cst_11 : f32 to vector<256x64xf32>
    %16 = arith.maximumf %14, %15 : vector<256x64xf32>
    %17 = arith.truncf %16 : vector<256x64xf32> to vector<256x64xbf16>
    %c0_12 = arith.constant 0 : index
    %c0_13 = arith.constant 0 : index
    %18 = vector.load %arg6[%c0_12, %c0_13] : memref<64x32xbf16, #tpu.memory_space<vmem>>, vector<64x32xbf16>
    %cst_14 = arith.constant dense<0.000000e+00> : vector<256x32xf32>
    %19 = tpu.matmul %17, %18, %cst_14 {dimension_numbers = #tpu.dot_dimension_numbers<[1], [0], [0], [1], [0, 0, 1, 1], [], []>} : vector<256x64xbf16>, vector<64x32xbf16>, vector<256x32xf32> -> vector<256x32xf32>
    %c0_15 = arith.constant 0 : index
    %c0_16 = arith.constant 0 : index
    %20 = vector.load %arg7[%c0_15, %c0_16] : memref<1x32xf32, #tpu.memory_space<vmem>>, vector<1x32xf32>
    %21 = vector.broadcast %20 : vector<1x32xf32> to vector<256x32xf32>
    %22 = arith.addf %19, %21 : vector<256x32xf32>
    %cst_17 = arith.constant 0.000000e+00 : f32
    %23 = vector.broadcast %cst_17 : f32 to vector<256x32xf32>
    %24 = arith.maximumf %22, %23 : vector<256x32xf32>
    %25 = arith.truncf %24 : vector<256x32xf32> to vector<256x32xbf16>
    %c0_18 = arith.constant 0 : index
    %c0_19 = arith.constant 0 : index
    %26 = vector.load %arg8[%c0_18, %c0_19] : memref<32x1xbf16, #tpu.memory_space<vmem>>, vector<32x1xbf16>
    %cst_20 = arith.constant dense<0.000000e+00> : vector<256x1xf32>
    %27 = tpu.matmul %25, %26, %cst_20 {dimension_numbers = #tpu.dot_dimension_numbers<[1], [0], [0], [1], [0, 0, 1, 1], [], []>} : vector<256x32xbf16>, vector<32x1xbf16>, vector<256x1xf32> -> vector<256x1xf32>
    %c0_21 = arith.constant 0 : index
    %c0_22 = arith.constant 0 : index
    %28 = vector.load %arg9[%c0_21, %c0_22] : memref<1x1xf32, #tpu.memory_space<vmem>>, vector<1x1xf32>
    %29 = vector.broadcast %28 : vector<1x1xf32> to vector<256x1xf32>
    %30 = arith.addf %27, %29 : vector<256x1xf32>
    %c0_23 = arith.constant 0 : index
    %c0_24 = arith.constant 0 : index
    %31 = vector.load %arg10[%c0_23, %c0_24] : memref<256x1xf32, #tpu.memory_space<vmem>>, vector<256x1xf32>
    tpu.vector_store %arg10[%c0_23, %c0_24], %30 {strides = array<i32>} : memref<256x1xf32, #tpu.memory_space<vmem>>, vector<256x1xf32>,
    return
  }
  func.func @transform_0(%arg0: i32) -> (i32, i32) {
    %c0_i32 = arith.constant 0 : i32
    %c0_i32_0 = arith.constant 0 : i32
    return %arg0, %c0_i32 : i32, i32
  }
  func.func @transform_1(%arg0: i32) -> (i32, i32) {
    %c0_i32 = arith.constant 0 : i32
    %c0_i32_0 = arith.constant 0 : i32
    %c0_i32_1 = arith.constant 0 : i32
    return %c0_i32, %c0_i32_0 : i32, i32
  }
  func.func @transform_2(%arg0: i32) -> (i32, i32) {
    %c0_i32 = arith.constant 0 : i32
    %c0_i32_0 = arith.constant 0 : i32
    %c0_i32_1 = arith.constant 0 : i32
    return %c0_i32, %c0_i32_0 : i32, i32
  }
  func.func @transform_3(%arg0: i32) -> (i32, i32) {
    %c0_i32 = arith.constant 0 : i32
    %c0_i32_0 = arith.constant 0 : i32
    %c0_i32_1 = arith.constant 0 : i32
    return %c0_i32, %c0_i32_0 : i32, i32
  }
  func.func @transform_4(%arg0: i32) -> (i32, i32) {
    %c0_i32 = arith.constant 0 : i32
    %c0_i32_0 = arith.constant 0 : i32
    %c0_i32_1 = arith.constant 0 : i32
    return %c0_i32, %c0_i32_0 : i32, i32
  }
  func.func @transform_5(%arg0: i32) -> (i32, i32) {
    %c0_i32 = arith.constant 0 : i32
    %c0_i32_0 = arith.constant 0 : i32
    %c0_i32_1 = arith.constant 0 : i32
    return %c0_i32, %c0_i32_0 : i32, i32
  }
  func.func @transform_6(%arg0: i32) -> (i32, i32) {
    %c0_i32 = arith.constant 0 : i32
    %c0_i32_0 = arith.constant 0 : i32
    %c0_i32_1 = arith.constant 0 : i32
    return %c0_i32, %c0_i32_0 : i32, i32
  }
  func.func @transform_7(%arg0: i32) -> (i32, i32) {
    %c0_i32 = arith.constant 0 : i32
    %c0_i32_0 = arith.constant 0 : i32
    %c0_i32_1 = arith.constant 0 : i32
    return %c0_i32, %c0_i32_0 : i32, i32
  }
  func.func @transform_8(%arg0: i32) -> (i32, i32) {
    %c0_i32 = arith.constant 0 : i32
    %c0_i32_0 = arith.constant 0 : i32
    %c0_i32_1 = arith.constant 0 : i32
    return %c0_i32, %c0_i32_0 : i32, i32
  }
  func.func @transform_9(%arg0: i32) -> (i32, i32) {
    %c0_i32 = arith.constant 0 : i32
    %c0_i32_0 = arith.constant 0 : i32
    return %arg0, %c0_i32 : i32, i32
  }
}

</mosaic_0001>

<llo_original>
// kernel: tpu_custom_call.1
$region0: #{tpu_custom_call.1}
  #allocation0 [shape = 'u32[]', space=smem, size = 0x4, offset = 0x4, fixed_abs, tag = 'smem constant byte address 0x4 - core index']
  #allocation1 [shape = 'u32[144,128]{1,0:T(1,128)}', space=vmem, size = 0x12000, scoped, tag = 'internal scratch']
  #allocation2 [shape = 'f32[1,1]{1,0:T(1,128)S(1)}', space=vmem, size = 0x200, scoped, tag = 'scoped memory for tpu_custom_call.1']
  %s0 = inlined_call_operand.vmem [shape: f32[384,16], index: 0, kind: input, shape index: {}]
  %s1 = inlined_call_operand.vmem [shape: bf16[16,128], index: 1, kind: input, shape index: {}]
  %s2 = inlined_call_operand.vmem [shape: f32[1,128], index: 2, kind: input, shape index: {}]
  %s3 = inlined_call_operand.vmem [shape: bf16[128,64], index: 3, kind: input, shape index: {}]
  %s4 = inlined_call_operand.vmem [shape: f32[1,64], index: 4, kind: input, shape index: {}]
  %s5 = inlined_call_operand.vmem [shape: bf16[64,32], index: 5, kind: input, shape index: {}]
  %s6 = inlined_call_operand.vmem [shape: f32[1,32], index: 6, kind: input, shape index: {}]
  %s7 = inlined_call_operand.vmem [shape: bf16[32,1], index: 7, kind: input, shape index: {}]
  %s8 = inlined_call_operand.<no memory space> [shape: f32[1,1], index: 8, kind: input, shape index: {}]
  %s9 = inlined_call_operand.vmem [shape: f32[384,1], index: 9, kind: output, shape index: {}]
  %s10 = sld [smem:[#allocation0]]
  $region117: #{tpu_custom_call.1} parent=0
    _
  %s12 = ssub.s32 1, %s10
  %s13 = scalar_select 0, %s12, %s10
  %v14 = vstv %s8
  %15 = vst [vmem:[#allocation2] sm:$0x1] %v14
  $region1: #{tpu_custom_call.1} parent=0
    #allocation3 [shape = 'u8[262144]{0}', space=vmem, size = 0x40000, scoped, tag = 'output window, operand 0']
    loop: start=0, step=1, limit=4
    $region2: #{tpu_custom_call.1} parent=1 // loop_pre_header
      _
    $region3: #{tpu_custom_call.1} parent=1 // loop_header
      %s17 = sphi 0, %s21
      %p18 = scmp.ge.s32.totalorder %s17, 4
      %s27 = sphi 0, %s29
      %s30 = sphi 0, %s27
      %s31 = sphi 0, %s30
      %s47 = sphi 0, %s31
      %s51 = sphi 0, %s51
      %s53 = sphi 0, %s51
      %s54 = sphi 0, %s53
      %s68 = sphi 0, %s54
      %s72 = sphi 0, %s72
      %s74 = sphi 0, %s72
      %s75 = sphi 0, %s74
      %s89 = sphi 0, %s75
      %s93 = sphi 0, %s93
      %s95 = sphi 0, %s93
      %s96 = sphi 0, %s95
      %s110 = sphi 0, %s96
      %s114 = sphi 0, %s114
      %s116 = sphi 0, %s114
      %s117 = sphi 0, %s116
      %s131 = sphi 0, %s117
      %s135 = sphi 0, %s135
      %s137 = sphi 0, %s135
      %s138 = sphi 0, %s137
      %s152 = sphi 0, %s138
      %s156 = sphi 0, %s156
      %s158 = sphi 0, %s156
      %s159 = sphi 0, %s158
      %s173 = sphi 0, %s159
      %s177 = sphi 0, %s177
      %s179 = sphi 0, %s177
      %s180 = sphi 0, %s179
      %s194 = sphi 0, %s180
      %s198 = sphi 0, %s198
      %s200 = sphi 0, %s198
      %s201 = sphi 0, %s200
      %s215 = sphi 0, %s201
      %s221 = sphi 0, %s223
      %s224 = sphi 0, %s221
      %s225 = sphi 0, %s224
      %s241 = sphi 0, %s225
    $region4: #{tpu_custom_call.1} parent=1 // loop_header_branch
      %20 = sbr.rel (%p18) target = $region8
    $region5: #{tpu_custom_call.1} parent=1 // loop_body
      %s22 = ssub.s32 %s17, 1
      %s23 = ssub.s32 %s17, 2
      %s24 = sadd.s32 %s17, 1
      %s25 = ssub.s32 %s17, %s24
      %p26 = scmp.eq.s32.totalorder %s25, 0
      %s28 = sadd.s32 %s27, 1
      %s29 = scalar_select %p26, %s27, %s28
      %p32 = pneg %p26
      %p33 = scmp.eq.s32.totalorder %s17, 1
      %p34 = por %p32, %p33
      %p35 = scmp.ne.s32.totalorder %s27, %s30
      %p36 = scmp.eq.s32.totalorder %s17, 0
      %p37 = por %p35, %p36
      %p38 = scmp.ne.s32.totalorder %s27, %s30
      %p39 = scmp.eq.s32.totalorder %s22, 1
      %p40 = por %p38, %p39
      %p41 = scmp.ne.s32.totalorder %s30, %s31
      %p42 = scmp.eq.s32.totalorder %s22, 0
      %p43 = por %p41, %p42
      %p44 = scmp.ne.s32.totalorder %s30, %s31
      %p45 = scmp.eq.s32.totalorder %s23, 1
      %p46 = por %p44, %p45
      %p48 = scmp.ne.s32.totalorder %s31, %s47
      %p49 = scmp.eq.s32.totalorder %s23, 0
      %p50 = por %p48, %p49
      %s52 = sadd.s32 %s51, 1
      %p55 = scmp.eq.s32.totalorder %s17, 1
      %p56 = scmp.ne.s32.totalorder %s51, %s53
      %p57 = scmp.eq.s32.totalorder %s17, 0
      %p58 = por %p56, %p57
      %p59 = scmp.ne.s32.totalorder %s51, %s53
      %p60 = scmp.eq.s32.totalorder %s22, 1
      %p61 = por %p59, %p60
      %p62 = scmp.ne.s32.totalorder %s53, %s54
      %p63 = scmp.eq.s32.totalorder %s22, 0
      %p64 = por %p62, %p63
      %p65 = scmp.ne.s32.totalorder %s53, %s54
      %p66 = scmp.eq.s32.totalorder %s23, 1
      %p67 = por %p65, %p66
      %p69 = scmp.ne.s32.totalorder %s54, %s68
      %p70 = scmp.eq.s32.totalorder %s23, 0
      %p71 = por %p69, %p70
      %s73 = sadd.s32 %s72, 1
      %p76 = scmp.eq.s32.totalorder %s17, 1
      %p77 = scmp.ne.s32.totalorder %s72, %s74
      %p78 = scmp.eq.s32.totalorder %s17, 0
      %p79 = por %p77, %p78
      %p80 = scmp.ne.s32.totalorder %s72, %s74
      %p81 = scmp.eq.s32.totalorder %s22, 1
      %p82 = por %p80, %p81
      %p83 = scmp.ne.s32.totalorder %s74, %s75
      %p84 = scmp.eq.s32.totalorder %s22, 0
      %p85 = por %p83, %p84
      %p86 = scmp.ne.s32.totalorder %s74, %s75
      %p87 = scmp.eq.s32.totalorder %s23, 1
      %p88 = por %p86, %p87
      %p90 = scmp.ne.s32.totalorder %s75, %s89
      %p91 = scmp.eq.s32.totalorder %s23, 0
      %p92 = por %p90, %p91
      %s94 = sadd.s32 %s93, 1
      %p97 = scmp.eq.s32.totalorder %s17, 1
      %p98 = scmp.ne.s32.totalorder %s93, %s95
      %p99 = scmp.eq.s32.totalorder %s17, 0
      %p100 = por %p98, %p99
      %p101 = scmp.ne.s32.totalorder %s93, %s95
      %p102 = scmp.eq.s32.totalorder %s22, 1
      %p103 = por %p101, %p102
      %p104 = scmp.ne.s32.totalorder %s95, %s96
      %p105 = scmp.eq.s32.totalorder %s22, 0
      %p106 = por %p104, %p105
      %p107 = scmp.ne.s32.totalorder %s95, %s96
      %p108 = scmp.eq.s32.totalorder %s23, 1
      %p109 = por %p107, %p108
      %p111 = scmp.ne.s32.totalorder %s96, %s110
      %p112 = scmp.eq.s32.totalorder %s23, 0
      %p113 = por %p111, %p112
      %s115 = sadd.s32 %s114, 1
      %p118 = scmp.eq.s32.totalorder %s17, 1
      %p119 = scmp.ne.s32.totalorder %s114, %s116
      %p120 = scmp.eq.s32.totalorder %s17, 0
      %p121 = por %p119, %p120
      %p122 = scmp.ne.s32.totalorder %s114, %s116
      %p123 = scmp.eq.s32.totalorder %s22, 1
      %p124 = por %p122, %p123
      %p125 = scmp.ne.s32.totalorder %s116, %s117
      %p126 = scmp.eq.s32.totalorder %s22, 0
      %p127 = por %p125, %p126
      %p128 = scmp.ne.s32.totalorder %s116, %s117
      %p129 = scmp.eq.s32.totalorder %s23, 1
      %p130 = por %p128, %p129
      %p132 = scmp.ne.s32.totalorder %s117, %s131
      %p133 = scmp.eq.s32.totalorder %s23, 0
      %p134 = por %p132, %p133
      %s136 = sadd.s32 %s135, 1
      %p139 = scmp.eq.s32.totalorder %s17, 1
      %p140 = scmp.ne.s32.totalorder %s135, %s137
      %p141 = scmp.eq.s32.totalorder %s17, 0
      %p142 = por %p140, %p141
      %p143 = scmp.ne.s32.totalorder %s135, %s137
      %p144 = scmp.eq.s32.totalorder %s22, 1
      %p145 = por %p143, %p144
      %p146 = scmp.ne.s32.totalorder %s137, %s138
      %p147 = scmp.eq.s32.totalorder %s22, 0
      %p148 = por %p146, %p147
      %p149 = scmp.ne.s32.totalorder %s137, %s138
      %p150 = scmp.eq.s32.totalorder %s23, 1
      %p151 = por %p149, %p150
      %p153 = scmp.ne.s32.totalorder %s138, %s152
      %p154 = scmp.eq.s32.totalorder %s23, 0
      %p155 = por %p153, %p154
      %s157 = sadd.s32 %s156, 1
      %p160 = scmp.eq.s32.totalorder %s17, 1
      %p161 = scmp.ne.s32.totalorder %s156, %s158
      %p162 = scmp.eq.s32.totalorder %s17, 0
      %p163 = por %p161, %p162
      %p164 = scmp.ne.s32.totalorder %s156, %s158
      %p165 = scmp.eq.s32.totalorder %s22, 1
      %p166 = por %p164, %p165
      %p167 = scmp.ne.s32.totalorder %s158, %s159
      %p168 = scmp.eq.s32.totalorder %s22, 0
      %p169 = por %p167, %p168
      %p170 = scmp.ne.s32.totalorder %s158, %s159
      %p171 = scmp.eq.s32.totalorder %s23, 1
      %p172 = por %p170, %p171
      %p174 = scmp.ne.s32.totalorder %s159, %s173
      %p175 = scmp.eq.s32.totalorder %s23, 0
      %p176 = por %p174, %p175
      %s178 = sadd.s32 %s177, 1
      %p181 = scmp.eq.s32.totalorder %s17, 1
      %p182 = scmp.ne.s32.totalorder %s177, %s179
      %p183 = scmp.eq.s32.totalorder %s17, 0
      %p184 = por %p182, %p183
      %p185 = scmp.ne.s32.totalorder %s177, %s179
      %p186 = scmp.eq.s32.totalorder %s22, 1
      %p187 = por %p185, %p186
      %p188 = scmp.ne.s32.totalorder %s179, %s180
      %p189 = scmp.eq.s32.totalorder %s22, 0
      %p190 = por %p188, %p189
      %p191 = scmp.ne.s32.totalorder %s179, %s180
      %p192 = scmp.eq.s32.totalorder %s23, 1
      %p193 = por %p191, %p192
      %p195 = scmp.ne.s32.totalorder %s180, %s194
      %p196 = scmp.eq.s32.totalorder %s23, 0
      %p197 = por %p195, %p196
      %s199 = sadd.s32 %s198, 1
      %p202 = scmp.eq.s32.totalorder %s17, 1
      %p203 = scmp.ne.s32.totalorder %s198, %s200
      %p204 = scmp.eq.s32.totalorder %s17, 0
      %p205 = por %p203, %p204
      %p206 = scmp.ne.s32.totalorder %s198, %s200
      %p207 = scmp.eq.s32.totalorder %s22, 1
      %p208 = por %p206, %p207
      %p209 = scmp.ne.s32.totalorder %s200, %s201
      %p210 = scmp.eq.s32.totalorder %s22, 0
      %p211 = por %p209, %p210
      %p212 = scmp.ne.s32.totalorder %s200, %s201
      %p213 = scmp.eq.s32.totalorder %s23, 1
      %p214 = por %p212, %p213
      %p216 = scmp.ne.s32.totalorder %s201, %s215
      %p217 = scmp.eq.s32.totalorder %s23, 0
      %p218 = por %p216, %p217
      %s219 = ssub.s32 %s17, %s24
      %p220 = scmp.eq.s32.totalorder %s219, 0
      %s222 = sadd.s32 %s221, 1
      %s223 = scalar_select %p220, %s221, %s222
      %p226 = pneg %p220
      %p227 = scmp.eq.s32.totalorder %s17, 1
      %p228 = por %p226, %p227
      %p229 = scmp.ne.s32.totalorder %s221, %s224
      %p230 = scmp.eq.s32.totalorder %s17, 0
      %p231 = por %p229, %p230
      %p232 = scmp.ne.s32.totalorder %s221, %s224
      %p233 = scmp.eq.s32.totalorder %s22, 1
      %p234 = por %p232, %p233
      %p235 = scmp.ne.s32.totalorder %s224, %s225
      %p236 = scmp.eq.s32.totalorder %s22, 0
      %p237 = por %p235, %p236
      %p238 = scmp.ne.s32.totalorder %s224, %s225
      %p239 = scmp.eq.s32.totalorder %s23, 1
      %p240 = por %p238, %p239
      %p242 = scmp.ne.s32.totalorder %s225, %s241
      %p243 = scmp.eq.s32.totalorder %s23, 0
      %p244 = por %p242, %p243
      %p245 = scmp.le.s32.totalorder 1, %s17
      %p246 = scmp.lt.s32.totalorder %s17, 3
      %p247 = pnand %p245, %p246
      %p248 = pneg %p247
      // Predicated region
      $region9: #{tpu_custom_call.1} parent=5 // pred_check
        _
      $region10: #{tpu_custom_call.1} parent=5 // pred_check_branch
        %250 = sbr.rel (%p247) target = $region12
      $region11: #{tpu_custom_call.1} parent=5 // pred_region
        %s251 = ssub.s32 %s17, 1
        // Predicated region
        $region13: #{tpu_custom_call.1} parent=11 // pred_check
          %p252 = pneg %p64
        $region14: #{tpu_custom_call.1} parent=11 // pred_check_branch
          %254 = sbr.rel (%p252) target = $region16
        $region15: #{tpu_custom_call.1} parent=11 // pred_region
          _
        $region16: #{tpu_custom_call.1} parent=11 // pred_fallthru
          _
        // Predicated region
        $region17: #{tpu_custom_call.1} parent=11 // pred_check
          %p255 = pneg %p85
        $region18: #{tpu_custom_call.1} parent=11 // pred_check_branch
          %257 = sbr.rel (%p255) target = $region20
        $region19: #{tpu_custom_call.1} parent=11 // pred_region
          _
        $region20: #{tpu_custom_call.1} parent=11 // pred_fallthru
          _
        // Predicated region
        $region21: #{tpu_custom_call.1} parent=11 // pred_check
          %p258 = pneg %p106
        $region22: #{tpu_custom_call.1} parent=11 // pred_check_branch
          %260 = sbr.rel (%p258) target = $region24
        $region23: #{tpu_custom_call.1} parent=11 // pred_region
          _
        $region24: #{tpu_custom_call.1} parent=11 // pred_fallthru
          _
        // Predicated region
        $region25: #{tpu_custom_call.1} parent=11 // pred_check
          %p261 = pneg %p127
        $region26: #{tpu_custom_call.1} parent=11 // pred_check_branch
          %263 = sbr.rel (%p261) target = $region28
        $region27: #{tpu_custom_call.1} parent=11 // pred_region
          _
        $region28: #{tpu_custom_call.1} parent=11 // pred_fallthru
          _
        // Predicated region
        $region29: #{tpu_custom_call.1} parent=11 // pred_check
          %p264 = pneg %p148
        $region30: #{tpu_custom_call.1} parent=11 // pred_check_branch
          %266 = sbr.rel (%p264) target = $region32
        $region31: #{tpu_custom_call.1} parent=11 // pred_region
          _
        $region32: #{tpu_custom_call.1} parent=11 // pred_fallthru
          _
        // Predicated region
        $region33: #{tpu_custom_call.1} parent=11 // pred_check
          %p267 = pneg %p169
        $region34: #{tpu_custom_call.1} parent=11 // pred_check_branch
          %269 = sbr.rel (%p267) target = $region36
        $region35: #{tpu_custom_call.1} parent=11 // pred_region
          _
        $region36: #{tpu_custom_call.1} parent=11 // pred_fallthru
          _
        // Predicated region
        $region37: #{tpu_custom_call.1} parent=11 // pred_check
          %p270 = pneg %p190
        $region38: #{tpu_custom_call.1} parent=11 // pred_check_branch
          %272 = sbr.rel (%p270) target = $region40
        $region39: #{tpu_custom_call.1} parent=11 // pred_region
          _
        $region40: #{tpu_custom_call.1} parent=11 // pred_fallthru
          _
        // Predicated region
        $region41: #{tpu_custom_call.1} parent=11 // pred_check
          %p273 = pneg %p211
        $region42: #{tpu_custom_call.1} parent=11 // pred_check_branch
          %275 = sbr.rel (%p273) target = $region44
        $region43: #{tpu_custom_call.1} parent=11 // pred_region
          _
        $region44: #{tpu_custom_call.1} parent=11 // pred_fallthru
          _
      $region12: #{tpu_custom_call.1} parent=5 // pred_fallthru
        _
      %p276 = scmp.lt.s32.totalorder %s17, 2
      // Predicated region
      $region45: #{tpu_custom_call.1} parent=5 // pred_check
        %p277 = pneg %p276
      $region46: #{tpu_custom_call.1} parent=5 // pred_check_branch
        %279 = sbr.rel (%p277) target = $region48
      $region47: #{tpu_custom_call.1} parent=5 // pred_region
        // Predicated region
        $region49: #{tpu_custom_call.1} parent=47 // pred_check
          %p280 = pneg %p37
        $region50: #{tpu_custom_call.1} parent=47 // pred_check_branch
          %282 = sbr.rel (%p280) target = $region52
        $region51: #{tpu_custom_call.1} parent=47 // pred_region
          %s283 = smul.u32 32, %s17
          %s284 = ssub.s32 48, %s283
          %p285 = scmp.lt.s32.totalorder %s284, 32
          %s286 = scalar_select %p285, %s284, 32
          %s287 = smul.u32 128, %s286
          %p288 = scmp.lt.s32.totalorder %s283, 47
          %s289 = scalar_select %p288, %s283, 47
          %s290 = smul.addr %s289, 8
          %s291 = scalar_lea.vmem %s0, %s290
          %s292 = smul.u32 32, %s17
          %s293 = ssub.s32 48, %s292
          %p294 = scmp.lt.s32.totalorder %s293, 32
          %s295 = scalar_select %p294, %s293, 32
          %s296 = smul.u32 128, %s295
        $region52: #{tpu_custom_call.1} parent=47 // pred_fallthru
          _
      $region48: #{tpu_custom_call.1} parent=5 // pred_fallthru
        _
      %p297 = scmp.le.s32.totalorder 1, %s17
      %p298 = scmp.lt.s32.totalorder %s17, 3
      %p299 = pnand %p297, %p298
      %p300 = pneg %p299
      // Predicated region
      $region53: #{tpu_custom_call.1} parent=5 // pred_check
        _
      $region54: #{tpu_custom_call.1} parent=5 // pred_check_branch
        %302 = sbr.rel (%p299) target = $region56
      $region55: #{tpu_custom_call.1} parent=5 // pred_region
        %s303 = ssub.s32 %s17, 1
        %s304 = smul.u32 32, %s22
        %s305 = ssub.s32 48, %s304
        %p306 = scmp.lt.s32.totalorder %s305, 32
        %s307 = scalar_select %p306, %s305, 32
        %s308 = smul.u32 128, %s307
        %p309 = scmp.lt.s32.totalorder %s304, 47
        %s310 = scalar_select %p309, %s304, 47
        %s311 = smul.addr %s310, 8
        %s312 = scalar_lea.vmem %s0, %s311
        %p313 = pneg %p43
        %p314 = pneg %p40
        %p315 = pneg %p64
        %p316 = pneg %p61
        %p317 = pneg %p85
        %p318 = pneg %p82
        %p319 = pneg %p106
        %p320 = pneg %p103
        %p321 = pneg %p127
        %p322 = pneg %p124
        %p323 = pneg %p148
        %p324 = pneg %p145
        %p325 = pneg %p169
        %p326 = pneg %p166
        %p327 = pneg %p190
        %p328 = pneg %p187
        %p329 = pneg %p211
        %p330 = pneg %p208
        %p331 = pneg %p237
        %p332 = pneg %p234
        %s333 = sand.u32 %s224, 1
        %s334 = sand.u32 %s224, 1
        %s335 = smul.addr %s334, 256
        %s336 = scalar_lea.vmem [#allocation3], %s335
        %s337 = smul.u32 32, %s22
        %s338 = ssub.s32 48, %s337
        %p339 = scmp.lt.s32.totalorder %s338, 32
        %s340 = scalar_select %p339, %s338, 32
        %s341 = smul.u32 128, %s340
        %p342 = scmp.lt.s32.totalorder %s337, 47
        %s343 = scalar_select %p342, %s337, 47
        %s344 = smul.addr %s343, 8
        %s345 = scalar_lea.vmem %s0, %s344
        %s346 = smul.u32 32, %s22
        %s347 = ssub.s32 48, %s346
        %p348 = scmp.lt.s32.totalorder %s347, 32
        %s349 = scalar_select %p348, %s347, 32
        %s350 = smul.u32 128, %s349
        %s351 = smul.u32 32, %s22
        %s352 = ssub.s32 48, %s351
        %p353 = scmp.lt.s32.totalorder %s352, 32
        %s354 = scalar_select %p353, %s352, 32
        %s355 = smul.u32 128, %s354
        %v357 = vld [vmem:[%s345] sm:$0xff]
        %v358 = vld [vmem:[%s345 + $0x8] sm:$0xff]
        %v359 = vld [vmem:[%s345 + $0x10] sm:$0xff]
        %v360 = vld [vmem:[%s345 + $0x18] sm:$0xff]
        %v361 = vld [vmem:[%s345 + $0x20] sm:$0xff]
        %v362 = vld [vmem:[%s345 + $0x28] sm:$0xff]
        %v363 = vld [vmem:[%s345 + $0x30] sm:$0xff]
        %v364 = vld [vmem:[%s345 + $0x38] sm:$0xff]
        %v365 = vld [vmem:[%s345 + $0x40] sm:$0xff]
        %v366 = vld [vmem:[%s345 + $0x48] sm:$0xff]
        %v367 = vld [vmem:[%s345 + $0x50] sm:$0xff]
        %v368 = vld [vmem:[%s345 + $0x58] sm:$0xff]
        %v369 = vld [vmem:[%s345 + $0x60] sm:$0xff]
        %v370 = vld [vmem:[%s345 + $0x68] sm:$0xff]
        %v371 = vld [vmem:[%s345 + $0x70] sm:$0xff]
        %v372 = vld [vmem:[%s345 + $0x78] sm:$0xff]
        %v373 = vld [vmem:[%s345 + $0x80] sm:$0xff]
        %v374 = vld [vmem:[%s345 + $0x88] sm:$0xff]
        %v375 = vld [vmem:[%s345 + $0x90] sm:$0xff]
        %v376 = vld [vmem:[%s345 + $0x98] sm:$0xff]
        %v377 = vld [vmem:[%s345 + $0xa0] sm:$0xff]
        %v378 = vld [vmem:[%s345 + $0xa8] sm:$0xff]
        %v379 = vld [vmem:[%s345 + $0xb0] sm:$0xff]
        %v380 = vld [vmem:[%s345 + $0xb8] sm:$0xff]
        %v381 = vld [vmem:[%s345 + $0xc0] sm:$0xff]
        %v382 = vld [vmem:[%s345 + $0xc8] sm:$0xff]
        %v383 = vld [vmem:[%s345 + $0xd0] sm:$0xff]
        %v384 = vld [vmem:[%s345 + $0xd8] sm:$0xff]
        %v385 = vld [vmem:[%s345 + $0xe0] sm:$0xff]
        %v386 = vld [vmem:[%s345 + $0xe8] sm:$0xff]
        %v387 = vld [vmem:[%s345 + $0xf0] sm:$0xff]
        %v388 = vld [vmem:[%s345 + $0xf8] sm:$0xff]
        %v389 = vpack.c.bf16 %v358, %v357
        %v390 = vpack.c.bf16 %v360, %v359
        %v391 = vpack.c.bf16 %v362, %v361
        %v392 = vpack.c.bf16 %v364, %v363
        %v393 = vpack.c.bf16 %v366, %v365
        %v394 = vpack.c.bf16 %v368, %v367
        %v395 = vpack.c.bf16 %v370, %v369
        %v396 = vpack.c.bf16 %v372, %v371
        %v397 = vpack.c.bf16 %v374, %v373
        %v398 = vpack.c.bf16 %v376, %v375
        %v399 = vpack.c.bf16 %v378, %v377
        %v400 = vpack.c.bf16 %v380, %v379
        %v401 = vpack.c.bf16 %v382, %v381
        %v402 = vpack.c.bf16 %v384, %v383
        %v403 = vpack.c.bf16 %v386, %v385
        %v404 = vpack.c.bf16 %v388, %v387
        %v405 = vld [vmem:[%s1] sm:$0xf]
        %v406 = vld [vmem:[%s1 + $0x4] sm:$0xf]
        %v407 = vld [vmem:[%s2] sm:$0x1]
        %v409 = vlaneseq
        %v410 = vshrl.u32 %v409, 7
        %v411 = vsub.s32 0, %v410
        %v412 = vrot.slane %v407, %v411
        %v416 = vunpack.c.l.b16 %v405
        %v417 = vunpack.c.l.b16 %v406
        %v418 = vpack.c.b16 %v417, %v416
        %vm420 = vcmask 130048
        %v422 = vsel %vm420, %v389, 0
        %v425 = vsel %vm420, %v390, 0
        %v428 = vsel %vm420, %v391, 0
        %v431 = vsel %vm420, %v392, 0
        %v434 = vsel %vm420, %v393, 0
        %v437 = vsel %vm420, %v394, 0
        %v440 = vsel %vm420, %v395, 0
        %v443 = vsel %vm420, %v396, 0
        %v446 = vsel %vm420, %v397, 0
        %v449 = vsel %vm420, %v398, 0
        %v452 = vsel %vm420, %v399, 0
        %v455 = vsel %vm420, %v400, 0
        %v458 = vsel %vm420, %v401, 0
        %v461 = vsel %vm420, %v402, 0
        %v464 = vsel %vm420, %v403, 0
        %v467 = vsel %vm420, %v404, 0
        %469 = vmatprep.subr.bf16.mxu0 0
        %470 = vmatpush1.bf16.msra.mxu0 %v418
        %471 = vmatprep.subr.bf16.mxu0 0
        %472 = vmatpush1.bf16.msra.mxu0 0
        %473 = vmatprep.subr.bf16.mxu0 0
        %474 = vmatpush1.bf16.msra.mxu0 0
        %475 = vmatprep.subr.bf16.mxu0 0
        %476 = vmatpush1.bf16.msra.mxu0 0
        %477 = vmatprep.subr.bf16.mxu0 0
        %478 = vmatpush1.bf16.msra.mxu0 0
        %479 = vmatprep.subr.bf16.mxu0 0
        %480 = vmatpush1.bf16.msra.mxu0 0
        %481 = vmatprep.subr.bf16.mxu0 0
        %482 = vmatpush1.bf16.msra.mxu0 0
        %483 = vmatprep.subr.bf16.mxu0 0
        %484 = vmatpush1.bf16.msra.mxu0 0
        %485 = vmatprep.subr.bf16.mxu0 0
        %486 = vmatpush1.bf16.msra.mxu0 0
        %487 = vmatprep.subr.bf16.mxu0 0
        %488 = vmatpush1.bf16.msra.mxu0 0
        %489 = vmatprep.subr.bf16.mxu0 0
        %490 = vmatpush1.bf16.msra.mxu0 0
        %491 = vmatprep.subr.bf16.mxu0 0
        %492 = vmatpush1.bf16.msra.mxu0 0
        %493 = vmatprep.subr.bf16.mxu0 0
        %494 = vmatpush1.bf16.msra.mxu0 0
        %495 = vmatprep.subr.bf16.mxu0 0
        %496 = vmatpush1.bf16.msra.mxu0 0
        %497 = vmatprep.subr.bf16.mxu0 0
        %498 = vmatpush1.bf16.msra.mxu0 0
        %499 = vmatprep.subr.bf16.mxu0 0
        %500 = vmatpush1.bf16.msra.mxu0 0
        %501 = vmatprep.mubr.bf16.mxu0 0
        %502 = vmatmul.mubr.bf16.gmra.mrb[0].mxu0 %v422
        %v503 = vpop.f32.mrb[0].mxu0
        %v504 = vadd.f32 %v412, %v503
        %v505 = vpop.f32.mrb[0].mxu0
        %v506 = vpop.f32.mrb[0].mxu0
        %v507 = vadd.f32 %v412, %v506
        %v508 = vpop.f32.mrb[0].mxu0
        %509 = vmatprep.mubr.bf16.mxu0 0
        %510 = vmatmul.mubr.bf16.gmra.mrb[0].mxu0 %v425
        %v511 = vpop.f32.mrb[0].mxu0
        %v512 = vadd.f32 %v412, %v511
        %v513 = vpop.f32.mrb[0].mxu0
        %v514 = vpop.f32.mrb[0].mxu0
        %v515 = vadd.f32 %v412, %v514
        %v516 = vpop.f32.mrb[0].mxu0
        %517 = vmatprep.mubr.bf16.mxu0 0
        %518 = vmatmul.mubr.bf16.gmra.mrb[0].mxu0 %v428
        %v519 = vpop.f32.mrb[0].mxu0
        %v520 = vadd.f32 %v412, %v519
        %v521 = vpop.f32.mrb[0].mxu0
        %v522 = vpop.f32.mrb[0].mxu0
        %v523 = vadd.f32 %v412, %v522
        %v524 = vpop.f32.mrb[0].mxu0
        %525 = vmatprep.mubr.bf16.mxu0 0
        %526 = vmatmul.mubr.bf16.gmra.mrb[0].mxu0 %v431
        %v527 = vpop.f32.mrb[0].mxu0
        %v528 = vadd.f32 %v412, %v527
        %v529 = vpop.f32.mrb[0].mxu0
        %v530 = vpop.f32.mrb[0].mxu0
        %v531 = vadd.f32 %v412, %v530
        %v532 = vpop.f32.mrb[0].mxu0
        %533 = vmatprep.mubr.bf16.mxu0 0
        %534 = vmatmul.mubr.bf16.gmra.mrb[0].mxu0 %v434
        %v535 = vpop.f32.mrb[0].mxu0
        %v536 = vadd.f32 %v412, %v535
        %v537 = vpop.f32.mrb[0].mxu0
        %v538 = vpop.f32.mrb[0].mxu0
        %v539 = vadd.f32 %v412, %v538
        %v540 = vpop.f32.mrb[0].mxu0
        %541 = vmatprep.mubr.bf16.mxu0 0
        %542 = vmatmul.mubr.bf16.gmra.mrb[0].mxu0 %v437
        %v543 = vpop.f32.mrb[0].mxu0
        %v544 = vadd.f32 %v412, %v543
        %v545 = vpop.f32.mrb[0].mxu0
        %v546 = vpop.f32.mrb[0].mxu0
        %v547 = vadd.f32 %v412, %v546
        %v548 = vpop.f32.mrb[0].mxu0
        %549 = vmatprep.mubr.bf16.mxu0 0
        %550 = vmatmul.mubr.bf16.gmra.mrb[0].mxu0 %v440
        %v551 = vpop.f32.mrb[0].mxu0
        %v552 = vadd.f32 %v412, %v551
        %v553 = vpop.f32.mrb[0].mxu0
        %v554 = vpop.f32.mrb[0].mxu0
        %v555 = vadd.f32 %v412, %v554
        %v556 = vpop.f32.mrb[0].mxu0
        %557 = vmatprep.mubr.bf16.mxu0 0
        %558 = vmatmul.mubr.bf16.gmra.mrb[0].mxu0 %v443
        %v559 = vpop.f32.mrb[0].mxu0
        %v560 = vadd.f32 %v412, %v559
        %v561 = vpop.f32.mrb[0].mxu0
        %v562 = vpop.f32.mrb[0].mxu0
        %v563 = vadd.f32 %v412, %v562
        %v564 = vpop.f32.mrb[0].mxu0
        %565 = vmatprep.mubr.bf16.mxu0 0
        %566 = vmatmul.mubr.bf16.gmra.mrb[0].mxu0 %v446
        %v567 = vpop.f32.mrb[0].mxu0
        %v568 = vadd.f32 %v412, %v567
        %v569 = vpop.f32.mrb[0].mxu0
        %v570 = vpop.f32.mrb[0].mxu0
        %v571 = vadd.f32 %v412, %v570
        %v572 = vpop.f32.mrb[0].mxu0
        %573 = vmatprep.mubr.bf16.mxu0 0
        %574 = vmatmul.mubr.bf16.gmra.mrb[0].mxu0 %v449
        %v575 = vpop.f32.mrb[0].mxu0
        %v576 = vadd.f32 %v412, %v575
        %v577 = vpop.f32.mrb[0].mxu0
        %v578 = vpop.f32.mrb[0].mxu0
        %v579 = vadd.f32 %v412, %v578
        %v580 = vpop.f32.mrb[0].mxu0
        %581 = vmatprep.mubr.bf16.mxu0 0
        %582 = vmatmul.mubr.bf16.gmra.mrb[0].mxu0 %v452
        %v583 = vpop.f32.mrb[0].mxu0
        %v584 = vadd.f32 %v412, %v583
        %v585 = vpop.f32.mrb[0].mxu0
        %v586 = vpop.f32.mrb[0].mxu0
        %v587 = vadd.f32 %v412, %v586
        %v588 = vpop.f32.mrb[0].mxu0
        %589 = vmatprep.mubr.bf16.mxu0 0
        %590 = vmatmul.mubr.bf16.gmra.mrb[0].mxu0 %v455
        %v591 = vpop.f32.mrb[0].mxu0
        %v592 = vadd.f32 %v412, %v591
        %v593 = vpop.f32.mrb[0].mxu0
        %v594 = vpop.f32.mrb[0].mxu0
        %v595 = vadd.f32 %v412, %v594
        %v596 = vpop.f32.mrb[0].mxu0
        %597 = vmatprep.mubr.bf16.mxu0 0
        %598 = vmatmul.mubr.bf16.gmra.mrb[0].mxu0 %v458
        %v599 = vpop.f32.mrb[0].mxu0
        %v600 = vadd.f32 %v412, %v599
        %v601 = vpop.f32.mrb[0].mxu0
        %v602 = vpop.f32.mrb[0].mxu0
        %v603 = vadd.f32 %v412, %v602
        %v604 = vpop.f32.mrb[0].mxu0
        %605 = vmatprep.mubr.bf16.mxu0 0
        %606 = vmatmul.mubr.bf16.gmra.mrb[0].mxu0 %v461
        %v607 = vpop.f32.mrb[0].mxu0
        %v608 = vadd.f32 %v412, %v607
        %v609 = vpop.f32.mrb[0].mxu0
        %v610 = vpop.f32.mrb[0].mxu0
        %v611 = vadd.f32 %v412, %v610
        %v612 = vpop.f32.mrb[0].mxu0
        %613 = vmatprep.mubr.bf16.mxu0 0
        %614 = vmatmul.mubr.bf16.gmra.mrb[0].mxu0 %v464
        %v615 = vpop.f32.mrb[0].mxu0
        %v616 = vadd.f32 %v412, %v615
        %v617 = vpop.f32.mrb[0].mxu0
        %v618 = vpop.f32.mrb[0].mxu0
        %v619 = vadd.f32 %v412, %v618
        %v620 = vpop.f32.mrb[0].mxu0
        %621 = vmatprep.mubr.bf16.mxu0 0
        %622 = vmatmul.mubr.bf16.gmra.mrb[0].mxu0 %v467
        %v623 = vpop.f32.mrb[0].mxu0
        %v624 = vadd.f32 %v412, %v623
        %v625 = vpop.f32.mrb[0].mxu0
        %v626 = vpop.f32.mrb[0].mxu0
        %v627 = vadd.f32 %v412, %v626
        %v628 = vpop.f32.mrb[0].mxu0
        %629 = vdwg.mxu0
        %v630 = vmax.f32 %v504, 0.0
        %v631 = vmax.f32 %v507, 0.0
        %v632 = vmax.f32 %v512, 0.0
        %v633 = vmax.f32 %v515, 0.0
        %v634 = vmax.f32 %v520, 0.0
        %v635 = vmax.f32 %v523, 0.0
        %v636 = vmax.f32 %v528, 0.0
        %v637 = vmax.f32 %v531, 0.0
        %v638 = vmax.f32 %v536, 0.0
        %v639 = vmax.f32 %v539, 0.0
        %v640 = vmax.f32 %v544, 0.0
        %v641 = vmax.f32 %v547, 0.0
        %v642 = vmax.f32 %v552, 0.0
        %v643 = vmax.f32 %v555, 0.0
        %v644 = vmax.f32 %v560, 0.0
        %v645 = vmax.f32 %v563, 0.0
        %v646 = vmax.f32 %v568, 0.0
        %v647 = vmax.f32 %v571, 0.0
        %v648 = vmax.f32 %v576, 0.0
        %v649 = vmax.f32 %v579, 0.0
        %v650 = vmax.f32 %v584, 0.0
        %v651 = vmax.f32 %v587, 0.0
        %v652 = vmax.f32 %v592, 0.0
        %v653 = vmax.f32 %v595, 0.0
        %v654 = vmax.f32 %v600, 0.0
        %v655 = vmax.f32 %v603, 0.0
        %v656 = vmax.f32 %v608, 0.0
        %v657 = vmax.f32 %v611, 0.0
        %v658 = vmax.f32 %v616, 0.0
        %v659 = vmax.f32 %v619, 0.0
        %v660 = vmax.f32 %v624, 0.0
        %v661 = vmax.f32 %v627, 0.0
        %v662 = vpack.c.bf16 %v631, %v630
        %v663 = vpack.c.bf16 %v633, %v632
        %v664 = vpack.c.bf16 %v635, %v634
        %v665 = vpack.c.bf16 %v637, %v636
        %v666 = vpack.c.bf16 %v639, %v638
        %v667 = vpack.c.bf16 %v641, %v640
        %v668 = vpack.c.bf16 %v643, %v642
        %v669 = vpack.c.bf16 %v645, %v644
        %v670 = vpack.c.bf16 %v647, %v646
        %v671 = vpack.c.bf16 %v649, %v648
        %v672 = vpack.c.bf16 %v651, %v650
        %v673 = vpack.c.bf16 %v653, %v652
        %v674 = vpack.c.bf16 %v655, %v654
        %v675 = vpack.c.bf16 %v657, %v656
        %v676 = vpack.c.bf16 %v659, %v658
        %v677 = vpack.c.bf16 %v661, %v660
        %v678 = vld [vmem:[%s3] sm:$0xf]
        %v679 = vld [vmem:[%s3 + $0x4] sm:$0xf]
        %v680 = vld [vmem:[%s3 + $0x8] sm:$0xf]
        %v681 = vld [vmem:[%s3 + $0xc] sm:$0xf]
        %v682 = vld [vmem:[%s3 + $0x10] sm:$0xf]
        %v683 = vld [vmem:[%s3 + $0x14] sm:$0xf]
        %v684 = vld [vmem:[%s3 + $0x18] sm:$0xf]
        %v685 = vld [vmem:[%s3 + $0x1c] sm:$0xf]
        %v686 = vld [vmem:[%s3 + $0x20] sm:$0xf]
        %v687 = vld [vmem:[%s3 + $0x24] sm:$0xf]
        %v688 = vld [vmem:[%s3 + $0x28] sm:$0xf]
        %v689 = vld [vmem:[%s3 + $0x2c] sm:$0xf]
        %v690 = vld [vmem:[%s3 + $0x30] sm:$0xf]
        %v691 = vld [vmem:[%s3 + $0x34] sm:$0xf]
        %v692 = vld [vmem:[%s3 + $0x38] sm:$0xf]
        %v693 = vld [vmem:[%s3 + $0x3c] sm:$0xf]
        %v694 = vld [vmem:[%s4] sm:$0x1]
        %v696 = vlaneseq
        %v697 = vshrl.u32 %v696, 7
        %v698 = vsub.s32 0, %v697
        %v699 = vrot.slane %v694, %v698
        %v717 = vunpack.c.l.b16 %v678
        %v718 = vunpack.c.l.b16 %v679
        %v719 = vunpack.c.l.b16 %v680
        %v720 = vunpack.c.l.b16 %v681
        %v721 = vunpack.c.l.b16 %v682
        %v722 = vunpack.c.l.b16 %v683
        %v723 = vunpack.c.l.b16 %v684
        %v724 = vunpack.c.l.b16 %v685
        %v725 = vunpack.c.l.b16 %v686
        %v726 = vunpack.c.l.b16 %v687
        %v727 = vunpack.c.l.b16 %v688
        %v728 = vunpack.c.l.b16 %v689
        %v729 = vunpack.c.l.b16 %v690
        %v730 = vunpack.c.l.b16 %v691
        %v731 = vunpack.c.l.b16 %v692
        %v732 = vunpack.c.l.b16 %v693
        %v733 = vpack.c.b16 %v718, %v717
        %v734 = vpack.c.b16 %v720, %v719
        %v735 = vpack.c.b16 %v722, %v721
        %v736 = vpack.c.b16 %v724, %v723
        %v737 = vpack.c.b16 %v726, %v725
        %v738 = vpack.c.b16 %v728, %v727
        %v739 = vpack.c.b16 %v730, %v729
        %v740 = vpack.c.b16 %v732, %v731
        %749 = vmatprep.subr.bf16.mxu0 0
        %750 = vmatpush1.bf16.msra.mxu0 %v733
        %751 = vmatprep.subr.bf16.mxu0 0
        %752 = vmatpush1.bf16.msra.mxu0 %v734
        %753 = vmatprep.subr.bf16.mxu0 0
        %754 = vmatpush1.bf16.msra.mxu0 %v735
        %755 = vmatprep.subr.bf16.mxu0 0
        %756 = vmatpush1.bf16.msra.mxu0 %v736
        %757 = vmatprep.subr.bf16.mxu0 0
        %758 = vmatpush1.bf16.msra.mxu0 %v737
        %759 = vmatprep.subr.bf16.mxu0 0
        %760 = vmatpush1.bf16.msra.mxu0 %v738
        %761 = vmatprep.subr.bf16.mxu0 0
        %762 = vmatpush1.bf16.msra.mxu0 %v739
        %763 = vmatprep.subr.bf16.mxu0 0
        %764 = vmatpush1.bf16.msra.mxu0 %v740
        %765 = vmatprep.subr.bf16.mxu0 0
        %766 = vmatpush1.bf16.msra.mxu0 0
        %767 = vmatprep.subr.bf16.mxu0 0
        %768 = vmatpush1.bf16.msra.mxu0 0
        %769 = vmatprep.subr.bf16.mxu0 0
        %770 = vmatpush1.bf16.msra.mxu0 0
        %771 = vmatprep.subr.bf16.mxu0 0
        %772 = vmatpush1.bf16.msra.mxu0 0
        %773 = vmatprep.subr.bf16.mxu0 0
        %774 = vmatpush1.bf16.msra.mxu0 0
        %775 = vmatprep.subr.bf16.mxu0 0
        %776 = vmatpush1.bf16.msra.mxu0 0
        %777 = vmatprep.subr.bf16.mxu0 0
        %778 = vmatpush1.bf16.msra.mxu0 0
        %779 = vmatprep.subr.bf16.mxu0 0
        %780 = vmatpush1.bf16.msra.mxu0 0
        %781 = vmatprep.mubr.bf16.mxu0 0
        %782 = vmatmul.mubr.bf16.gmra.mrb[0].mxu0 %v662
        %v783 = vpop.f32.mrb[0].mxu0
        %v784 = vadd.f32 %v699, %v783
        %v785 = vpop.f32.mrb[0].mxu0
        %v786 = vpop.f32.mrb[0].mxu0
        %v787 = vadd.f32 %v699, %v786
        %v788 = vpop.f32.mrb[0].mxu0
        %789 = vmatprep.mubr.bf16.mxu0 0
        %790 = vmatmul.mubr.bf16.gmra.mrb[0].mxu0 %v663
        %v791 = vpop.f32.mrb[0].mxu0
        %v792 = vadd.f32 %v699, %v791
        %v793 = vpop.f32.mrb[0].mxu0
        %v794 = vpop.f32.mrb[0].mxu0
        %v795 = vadd.f32 %v699, %v794
        %v796 = vpop.f32.mrb[0].mxu0
        %797 = vmatprep.mubr.bf16.mxu0 0
        %798 = vmatmul.mubr.bf16.gmra.mrb[0].mxu0 %v664
        %v799 = vpop.f32.mrb[0].mxu0
        %v800 = vadd.f32 %v699, %v799
        %v801 = vpop.f32.mrb[0].mxu0
        %v802 = vpop.f32.mrb[0].mxu0
        %v803 = vadd.f32 %v699, %v802
        %v804 = vpop.f32.mrb[0].mxu0
        %805 = vmatprep.mubr.bf16.mxu0 0
        %806 = vmatmul.mubr.bf16.gmra.mrb[0].mxu0 %v665
        %v807 = vpop.f32.mrb[0].mxu0
        %v808 = vadd.f32 %v699, %v807
        %v809 = vpop.f32.mrb[0].mxu0
        %v810 = vpop.f32.mrb[0].mxu0
        %v811 = vadd.f32 %v699, %v810
        %v812 = vpop.f32.mrb[0].mxu0
        %813 = vmatprep.mubr.bf16.mxu0 0
        %814 = vmatmul.mubr.bf16.gmra.mrb[0].mxu0 %v666
        %v815 = vpop.f32.mrb[0].mxu0
        %v816 = vadd.f32 %v699, %v815
        %v817 = vpop.f32.mrb[0].mxu0
        %v818 = vpop.f32.mrb[0].mxu0
        %v819 = vadd.f32 %v699, %v818
        %v820 = vpop.f32.mrb[0].mxu0
        %821 = vmatprep.mubr.bf16.mxu0 0
        %822 = vmatmul.mubr.bf16.gmra.mrb[0].mxu0 %v667
        %v823 = vpop.f32.mrb[0].mxu0
        %v824 = vadd.f32 %v699, %v823
        %v825 = vpop.f32.mrb[0].mxu0
        %v826 = vpop.f32.mrb[0].mxu0
        %v827 = vadd.f32 %v699, %v826
        %v828 = vpop.f32.mrb[0].mxu0
        %829 = vmatprep.mubr.bf16.mxu0 0
        %830 = vmatmul.mubr.bf16.gmra.mrb[0].mxu0 %v668
        %v831 = vpop.f32.mrb[0].mxu0
        %v832 = vadd.f32 %v699, %v831
        %v833 = vpop.f32.mrb[0].mxu0
        %v834 = vpop.f32.mrb[0].mxu0
        %v835 = vadd.f32 %v699, %v834
        %v836 = vpop.f32.mrb[0].mxu0
        %837 = vmatprep.mubr.bf16.mxu0 0
        %838 = vmatmul.mubr.bf16.gmra.mrb[0].mxu0 %v669
        %v839 = vpop.f32.mrb[0].mxu0
        %v840 = vadd.f32 %v699, %v839
        %v841 = vpop.f32.mrb[0].mxu0
        %v842 = vpop.f32.mrb[0].mxu0
        %v843 = vadd.f32 %v699, %v842
        %v844 = vpop.f32.mrb[0].mxu0
        %845 = vmatprep.mubr.bf16.mxu0 0
        %846 = vmatmul.mubr.bf16.gmra.mrb[0].mxu0 %v670
        %v847 = vpop.f32.mrb[0].mxu0
        %v848 = vadd.f32 %v699, %v847
        %v849 = vpop.f32.mrb[0].mxu0
        %v850 = vpop.f32.mrb[0].mxu0
        %v851 = vadd.f32 %v699, %v850
        %v852 = vpop.f32.mrb[0].mxu0
        %853 = vmatprep.mubr.bf16.mxu0 0
        %854 = vmatmul.mubr.bf16.gmra.mrb[0].mxu0 %v671
        %v855 = vpop.f32.mrb[0].mxu0
        %v856 = vadd.f32 %v699, %v855
        %v857 = vpop.f32.mrb[0].mxu0
        %v858 = vpop.f32.mrb[0].mxu0
        %v859 = vadd.f32 %v699, %v858
        %v860 = vpop.f32.mrb[0].mxu0
        %861 = vmatprep.mubr.bf16.mxu0 0
        %862 = vmatmul.mubr.bf16.gmra.mrb[0].mxu0 %v672
        %v863 = vpop.f32.mrb[0].mxu0
        %v864 = vadd.f32 %v699, %v863
        %v865 = vpop.f32.mrb[0].mxu0
        %v866 = vpop.f32.mrb[0].mxu0
        %v867 = vadd.f32 %v699, %v866
        %v868 = vpop.f32.mrb[0].mxu0
        %869 = vmatprep.mubr.bf16.mxu0 0
        %870 = vmatmul.mubr.bf16.gmra.mrb[0].mxu0 %v673
        %v871 = vpop.f32.mrb[0].mxu0
        %v872 = vadd.f32 %v699, %v871
        %v873 = vpop.f32.mrb[0].mxu0
        %v874 = vpop.f32.mrb[0].mxu0
        %v875 = vadd.f32 %v699, %v874
        %v876 = vpop.f32.mrb[0].mxu0
        %877 = vmatprep.mubr.bf16.mxu0 0
        %878 = vmatmul.mubr.bf16.gmra.mrb[0].mxu0 %v674
        %v879 = vpop.f32.mrb[0].mxu0
        %v880 = vadd.f32 %v699, %v879
        %v881 = vpop.f32.mrb[0].mxu0
        %v882 = vpop.f32.mrb[0].mxu0
        %v883 = vadd.f32 %v699, %v882
        %v884 = vpop.f32.mrb[0].mxu0
        %885 = vmatprep.mubr.bf16.mxu0 0
        %886 = vmatmul.mubr.bf16.gmra.mrb[0].mxu0 %v675
        %v887 = vpop.f32.mrb[0].mxu0
        %v888 = vadd.f32 %v699, %v887
        %v889 = vpop.f32.mrb[0].mxu0
        %v890 = vpop.f32.mrb[0].mxu0
        %v891 = vadd.f32 %v699, %v890
        %v892 = vpop.f32.mrb[0].mxu0
        %893 = vmatprep.mubr.bf16.mxu0 0
        %894 = vmatmul.mubr.bf16.gmra.mrb[0].mxu0 %v676
        %v895 = vpop.f32.mrb[0].mxu0
        %v896 = vadd.f32 %v699, %v895
        %v897 = vpop.f32.mrb[0].mxu0
        %v898 = vpop.f32.mrb[0].mxu0
        %v899 = vadd.f32 %v699, %v898
        %v900 = vpop.f32.mrb[0].mxu0
        %901 = vmatprep.mubr.bf16.mxu0 0
        %902 = vmatmul.mubr.bf16.gmra.mrb[0].mxu0 %v677
        %v903 = vpop.f32.mrb[0].mxu0
        %v904 = vadd.f32 %v699, %v903
        %v905 = vpop.f32.mrb[0].mxu0
        %v906 = vpop.f32.mrb[0].mxu0
        %v907 = vadd.f32 %v699, %v906
        %v908 = vpop.f32.mrb[0].mxu0
        %909 = vdwg.mxu0
        %v910 = vmax.f32 %v784, 0.0
        %v911 = vmax.f32 %v787, 0.0
        %v912 = vmax.f32 %v792, 0.0
        %v913 = vmax.f32 %v795, 0.0
        %v914 = vmax.f32 %v800, 0.0
        %v915 = vmax.f32 %v803, 0.0
        %v916 = vmax.f32 %v808, 0.0
        %v917 = vmax.f32 %v811, 0.0
        %v918 = vmax.f32 %v816, 0.0
        %v919 = vmax.f32 %v819, 0.0
        %v920 = vmax.f32 %v824, 0.0
        %v921 = vmax.f32 %v827, 0.0
        %v922 = vmax.f32 %v832, 0.0
        %v923 = vmax.f32 %v835, 0.0
        %v924 = vmax.f32 %v840, 0.0
        %v925 = vmax.f32 %v843, 0.0
        %v926 = vmax.f32 %v848, 0.0
        %v927 = vmax.f32 %v851, 0.0
        %v928 = vmax.f32 %v856, 0.0
        %v929 = vmax.f32 %v859, 0.0
        %v930 = vmax.f32 %v864, 0.0
        %v931 = vmax.f32 %v867, 0.0
        %v932 = vmax.f32 %v872, 0.0
        %v933 = vmax.f32 %v875, 0.0
        %v934 = vmax.f32 %v880, 0.0
        %v935 = vmax.f32 %v883, 0.0
        %v936 = vmax.f32 %v888, 0.0
        %v937 = vmax.f32 %v891, 0.0
        %v938 = vmax.f32 %v896, 0.0
        %v939 = vmax.f32 %v899, 0.0
        %v940 = vmax.f32 %v904, 0.0
        %v941 = vmax.f32 %v907, 0.0
        %v942 = vpack.c.bf16 %v911, %v910
        %v943 = vpack.c.bf16 %v913, %v912
        %v944 = vpack.c.bf16 %v915, %v914
        %v945 = vpack.c.bf16 %v917, %v916
        %v946 = vpack.c.bf16 %v919, %v918
        %v947 = vpack.c.bf16 %v921, %v920
        %v948 = vpack.c.bf16 %v923, %v922
        %v949 = vpack.c.bf16 %v925, %v924
        %v950 = vpack.c.bf16 %v927, %v926
        %v951 = vpack.c.bf16 %v929, %v928
        %v952 = vpack.c.bf16 %v931, %v930
        %v953 = vpack.c.bf16 %v933, %v932
        %v954 = vpack.c.bf16 %v935, %v934
        %v955 = vpack.c.bf16 %v937, %v936
        %v956 = vpack.c.bf16 %v939, %v938
        %v957 = vpack.c.bf16 %v941, %v940
        %v958 = vld [vmem:[%s5] sm:$0xf]
        %v959 = vld [vmem:[%s5 + $0x4] sm:$0xf]
        %v960 = vld [vmem:[%s5 + $0x8] sm:$0xf]
        %v961 = vld [vmem:[%s5 + $0xc] sm:$0xf]
        %v962 = vld [vmem:[%s5 + $0x10] sm:$0xf]
        %v963 = vld [vmem:[%s5 + $0x14] sm:$0xf]
        %v964 = vld [vmem:[%s5 + $0x18] sm:$0xf]
        %v965 = vld [vmem:[%s5 + $0x1c] sm:$0xf]
        %v966 = vld [vmem:[%s6] sm:$0x1]
        %v968 = vlaneseq
        %v969 = vshrl.u32 %v968, 7
        %v970 = vsub.s32 0, %v969
        %v971 = vrot.slane %v966, %v970
        %v981 = vunpack.c.l.b16 %v958
        %v982 = vunpack.c.l.b16 %v959
        %v983 = vunpack.c.l.b16 %v960
        %v984 = vunpack.c.l.b16 %v961
        %v985 = vunpack.c.l.b16 %v962
        %v986 = vunpack.c.l.b16 %v963
        %v987 = vunpack.c.l.b16 %v964
        %v988 = vunpack.c.l.b16 %v965
        %v989 = vpack.c.b16 %v982, %v981
        %v990 = vpack.c.b16 %v984, %v983
        %v991 = vpack.c.b16 %v986, %v985
        %v992 = vpack.c.b16 %v988, %v987
        %vm997 = vcmask 523264
        %v999 = vsel %vm997, %v942, 0
        %v1002 = vsel %vm997, %v943, 0
        %v1005 = vsel %vm997, %v944, 0
        %v1008 = vsel %vm997, %v945, 0
        %v1011 = vsel %vm997, %v946, 0
        %v1014 = vsel %vm997, %v947, 0
        %v1017 = vsel %vm997, %v948, 0
        %v1020 = vsel %vm997, %v949, 0
        %v1023 = vsel %vm997, %v950, 0
        %v1026 = vsel %vm997, %v951, 0
        %v1029 = vsel %vm997, %v952, 0
        %v1032 = vsel %vm997, %v953, 0
        %v1035 = vsel %vm997, %v954, 0
        %v1038 = vsel %vm997, %v955, 0
        %v1041 = vsel %vm997, %v956, 0
        %v1044 = vsel %vm997, %v957, 0
        %1046 = vmatprep.subr.bf16.mxu0 0
        %1047 = vmatpush1.bf16.msra.mxu0 %v989
        %1048 = vmatprep.subr.bf16.mxu0 0
        %1049 = vmatpush1.bf16.msra.mxu0 %v990
        %1050 = vmatprep.subr.bf16.mxu0 0
        %1051 = vmatpush1.bf16.msra.mxu0 %v991
        %1052 = vmatprep.subr.bf16.mxu0 0
        %1053 = vmatpush1.bf16.msra.mxu0 %v992
        %1054 = vmatprep.subr.bf16.mxu0 0
        %1055 = vmatpush1.bf16.msra.mxu0 0
        %1056 = vmatprep.subr.bf16.mxu0 0
        %1057 = vmatpush1.bf16.msra.mxu0 0
        %1058 = vmatprep.subr.bf16.mxu0 0
        %1059 = vmatpush1.bf16.msra.mxu0 0
        %1060 = vmatprep.subr.bf16.mxu0 0
        %1061 = vmatpush1.bf16.msra.mxu0 0
        %1062 = vmatprep.subr.bf16.mxu0 0
        %1063 = vmatpush1.bf16.msra.mxu0 0
        %1064 = vmatprep.subr.bf16.mxu0 0
        %1065 = vmatpush1.bf16.msra.mxu0 0
        %1066 = vmatprep.subr.bf16.mxu0 0
        %1067 = vmatpush1.bf16.msra.mxu0 0
        %1068 = vmatprep.subr.bf16.mxu0 0
        %1069 = vmatpush1.bf16.msra.mxu0 0
        %1070 = vmatprep.subr.bf16.mxu0 0
        %1071 = vmatpush1.bf16.msra.mxu0 0
        %1072 = vmatprep.subr.bf16.mxu0 0
        %1073 = vmatpush1.bf16.msra.mxu0 0
        %1074 = vmatprep.subr.bf16.mxu0 0
        %1075 = vmatpush1.bf16.msra.mxu0 0
        %1076 = vmatprep.subr.bf16.mxu0 0
        %1077 = vmatpush1.bf16.msra.mxu0 0
        %1078 = vmatprep.mubr.bf16.mxu0 0
        %1079 = vmatmul.mubr.bf16.gmra.mrb[0].mxu0 %v999
        %v1080 = vpop.f32.mrb[0].mxu0
        %v1081 = vadd.f32 %v971, %v1080
        %v1082 = vpop.f32.mrb[0].mxu0
        %v1083 = vpop.f32.mrb[0].mxu0
        %v1084 = vadd.f32 %v971, %v1083
        %v1085 = vpop.f32.mrb[0].mxu0
        %1086 = vmatprep.mubr.bf16.mxu0 0
        %1087 = vmatmul.mubr.bf16.gmra.mrb[0].mxu0 %v1002
        %v1088 = vpop.f32.mrb[0].mxu0
        %v1089 = vadd.f32 %v971, %v1088
        %v1090 = vpop.f32.mrb[0].mxu0
        %v1091 = vpop.f32.mrb[0].mxu0
        %v1092 = vadd.f32 %v971, %v1091
        %v1093 = vpop.f32.mrb[0].mxu0
        %1094 = vmatprep.mubr.bf16.mxu0 0
        %1095 = vmatmul.mubr.bf16.gmra.mrb[0].mxu0 %v1005
        %v1096 = vpop.f32.mrb[0].mxu0
        %v1097 = vadd.f32 %v971, %v1096
        %v1098 = vpop.f32.mrb[0].mxu0
        %v1099 = vpop.f32.mrb[0].mxu0
        %v1100 = vadd.f32 %v971, %v1099
        %v1101 = vpop.f32.mrb[0].mxu0
        %1102 = vmatprep.mubr.bf16.mxu0 0
        %1103 = vmatmul.mubr.bf16.gmra.mrb[0].mxu0 %v1008
        %v1104 = vpop.f32.mrb[0].mxu0
        %v1105 = vadd.f32 %v971, %v1104
        %v1106 = vpop.f32.mrb[0].mxu0
        %v1107 = vpop.f32.mrb[0].mxu0
        %v1108 = vadd.f32 %v971, %v1107
        %v1109 = vpop.f32.mrb[0].mxu0
        %1110 = vmatprep.mubr.bf16.mxu0 0
        %1111 = vmatmul.mubr.bf16.gmra.mrb[0].mxu0 %v1011
        %v1112 = vpop.f32.mrb[0].mxu0
        %v1113 = vadd.f32 %v971, %v1112
        %v1114 = vpop.f32.mrb[0].mxu0
        %v1115 = vpop.f32.mrb[0].mxu0
        %v1116 = vadd.f32 %v971, %v1115
        %v1117 = vpop.f32.mrb[0].mxu0
        %1118 = vmatprep.mubr.bf16.mxu0 0
        %1119 = vmatmul.mubr.bf16.gmra.mrb[0].mxu0 %v1014
        %v1120 = vpop.f32.mrb[0].mxu0
        %v1121 = vadd.f32 %v971, %v1120
        %v1122 = vpop.f32.mrb[0].mxu0
        %v1123 = vpop.f32.mrb[0].mxu0
        %v1124 = vadd.f32 %v971, %v1123
        %v1125 = vpop.f32.mrb[0].mxu0
        %1126 = vmatprep.mubr.bf16.mxu0 0
        %1127 = vmatmul.mubr.bf16.gmra.mrb[0].mxu0 %v1017
        %v1128 = vpop.f32.mrb[0].mxu0
        %v1129 = vadd.f32 %v971, %v1128
        %v1130 = vpop.f32.mrb[0].mxu0
        %v1131 = vpop.f32.mrb[0].mxu0
        %v1132 = vadd.f32 %v971, %v1131
        %v1133 = vpop.f32.mrb[0].mxu0
        %1134 = vmatprep.mubr.bf16.mxu0 0
        %1135 = vmatmul.mubr.bf16.gmra.mrb[0].mxu0 %v1020
        %v1136 = vpop.f32.mrb[0].mxu0
        %v1137 = vadd.f32 %v971, %v1136
        %v1138 = vpop.f32.mrb[0].mxu0
        %v1139 = vpop.f32.mrb[0].mxu0
        %v1140 = vadd.f32 %v971, %v1139
        %v1141 = vpop.f32.mrb[0].mxu0
        %1142 = vmatprep.mubr.bf16.mxu0 0
        %1143 = vmatmul.mubr.bf16.gmra.mrb[0].mxu0 %v1023
        %v1144 = vpop.f32.mrb[0].mxu0
        %v1145 = vadd.f32 %v971, %v1144
        %v1146 = vpop.f32.mrb[0].mxu0
        %v1147 = vpop.f32.mrb[0].mxu0
        %v1148 = vadd.f32 %v971, %v1147
        %v1149 = vpop.f32.mrb[0].mxu0
        %1150 = vmatprep.mubr.bf16.mxu0 0
        %1151 = vmatmul.mubr.bf16.gmra.mrb[0].mxu0 %v1026
        %v1152 = vpop.f32.mrb[0].mxu0
        %v1153 = vadd.f32 %v971, %v1152
        %v1154 = vpop.f32.mrb[0].mxu0
        %v1155 = vpop.f32.mrb[0].mxu0
        %v1156 = vadd.f32 %v971, %v1155
        %v1157 = vpop.f32.mrb[0].mxu0
        %1158 = vmatprep.mubr.bf16.mxu0 0
        %1159 = vmatmul.mubr.bf16.gmra.mrb[0].mxu0 %v1029
        %v1160 = vpop.f32.mrb[0].mxu0
        %v1161 = vadd.f32 %v971, %v1160
        %v1162 = vpop.f32.mrb[0].mxu0
        %v1163 = vpop.f32.mrb[0].mxu0
        %v1164 = vadd.f32 %v971, %v1163
        %v1165 = vpop.f32.mrb[0].mxu0
        %1166 = vmatprep.mubr.bf16.mxu0 0
        %1167 = vmatmul.mubr.bf16.gmra.mrb[0].mxu0 %v1032
        %v1168 = vpop.f32.mrb[0].mxu0
        %v1169 = vadd.f32 %v971, %v1168
        %v1170 = vpop.f32.mrb[0].mxu0
        %v1171 = vpop.f32.mrb[0].mxu0
        %v1172 = vadd.f32 %v971, %v1171
        %v1173 = vpop.f32.mrb[0].mxu0
        %1174 = vmatprep.mubr.bf16.mxu0 0
        %1175 = vmatmul.mubr.bf16.gmra.mrb[0].mxu0 %v1035
        %v1176 = vpop.f32.mrb[0].mxu0
        %v1177 = vadd.f32 %v971, %v1176
        %v1178 = vpop.f32.mrb[0].mxu0
        %v1179 = vpop.f32.mrb[0].mxu0
        %v1180 = vadd.f32 %v971, %v1179
        %v1181 = vpop.f32.mrb[0].mxu0
        %1182 = vmatprep.mubr.bf16.mxu0 0
        %1183 = vmatmul.mubr.bf16.gmra.mrb[0].mxu0 %v1038
        %v1184 = vpop.f32.mrb[0].mxu0
        %v1185 = vadd.f32 %v971, %v1184
        %v1186 = vpop.f32.mrb[0].mxu0
        %v1187 = vpop.f32.mrb[0].mxu0
        %v1188 = vadd.f32 %v971, %v1187
        %v1189 = vpop.f32.mrb[0].mxu0
        %1190 = vmatprep.mubr.bf16.mxu0 0
        %1191 = vmatmul.mubr.bf16.gmra.mrb[0].mxu0 %v1041
        %v1192 = vpop.f32.mrb[0].mxu0
        %v1193 = vadd.f32 %v971, %v1192
        %v1194 = vpop.f32.mrb[0].mxu0
        %v1195 = vpop.f32.mrb[0].mxu0
        %v1196 = vadd.f32 %v971, %v1195
        %v1197 = vpop.f32.mrb[0].mxu0
        %1198 = vmatprep.mubr.bf16.mxu0 0
        %1199 = vmatmul.mubr.bf16.gmra.mrb[0].mxu0 %v1044
        %v1200 = vpop.f32.mrb[0].mxu0
        %v1201 = vadd.f32 %v971, %v1200
        %v1202 = vpop.f32.mrb[0].mxu0
        %v1203 = vpop.f32.mrb[0].mxu0
        %v1204 = vadd.f32 %v971, %v1203
        %v1205 = vpop.f32.mrb[0].mxu0
        %1206 = vdwg.mxu0
        %v1207 = vmax.f32 %v1081, 0.0
        %v1208 = vmax.f32 %v1084, 0.0
        %v1209 = vmax.f32 %v1089, 0.0
        %v1210 = vmax.f32 %v1092, 0.0
        %v1211 = vmax.f32 %v1097, 0.0
        %v1212 = vmax.f32 %v1100, 0.0
        %v1213 = vmax.f32 %v1105, 0.0
        %v1214 = vmax.f32 %v1108, 0.0
        %v1215 = vmax.f32 %v1113, 0.0
        %v1216 = vmax.f32 %v1116, 0.0
        %v1217 = vmax.f32 %v1121, 0.0
        %v1218 = vmax.f32 %v1124, 0.0
        %v1219 = vmax.f32 %v1129, 0.0
        %v1220 = vmax.f32 %v1132, 0.0
        %v1221 = vmax.f32 %v1137, 0.0
        %v1222 = vmax.f32 %v1140, 0.0
        %v1223 = vmax.f32 %v1145, 0.0
        %v1224 = vmax.f32 %v1148, 0.0
        %v1225 = vmax.f32 %v1153, 0.0
        %v1226 = vmax.f32 %v1156, 0.0
        %v1227 = vmax.f32 %v1161, 0.0
        %v1228 = vmax.f32 %v1164, 0.0
        %v1229 = vmax.f32 %v1169, 0.0
        %v1230 = vmax.f32 %v1172, 0.0
        %v1231 = vmax.f32 %v1177, 0.0
        %v1232 = vmax.f32 %v1180, 0.0
        %v1233 = vmax.f32 %v1185, 0.0
        %v1234 = vmax.f32 %v1188, 0.0
        %v1235 = vmax.f32 %v1193, 0.0
        %v1236 = vmax.f32 %v1196, 0.0
        %v1237 = vmax.f32 %v1201, 0.0
        %v1238 = vmax.f32 %v1204, 0.0
        %v1239 = vpack.c.bf16 %v1208, %v1207
        %v1240 = vpack.c.bf16 %v1210, %v1209
        %v1241 = vpack.c.bf16 %v1212, %v1211
        %v1242 = vpack.c.bf16 %v1214, %v1213
        %v1243 = vpack.c.bf16 %v1216, %v1215
        %v1244 = vpack.c.bf16 %v1218, %v1217
        %v1245 = vpack.c.bf16 %v1220, %v1219
        %v1246 = vpack.c.bf16 %v1222, %v1221
        %v1247 = vpack.c.bf16 %v1224, %v1223
        %v1248 = vpack.c.bf16 %v1226, %v1225
        %v1249 = vpack.c.bf16 %v1228, %v1227
        %v1250 = vpack.c.bf16 %v1230, %v1229
        %v1251 = vpack.c.bf16 %v1232, %v1231
        %v1252 = vpack.c.bf16 %v1234, %v1233
        %v1253 = vpack.c.bf16 %v1236, %v1235
        %v1254 = vpack.c.bf16 %v1238, %v1237
        %v1255 = vld [vmem:[%s7] sm:$0xf]
        %v1256 = vld [vmem:[%s7 + $0x4] sm:$0xf]
        %v1257 = vld [vmem:[%s7 + $0x8] sm:$0xf]
        %v1258 = vld [vmem:[%s7 + $0xc] sm:$0xf]
        %v1259 = vld [vmem:[#allocation2] sm:$0x1]
        %v1261 = vlaneseq
        %v1262 = vshrl.u32 %v1261, 7
        %v1263 = vsub.s32 0, %v1262
        %v1264 = vrot.slane %v1259, %v1263
        %v1270 = vunpack.c.l.b16 %v1255
        %v1271 = vunpack.c.l.b16 %v1256
        %v1272 = vunpack.c.l.b16 %v1257
        %v1273 = vunpack.c.l.b16 %v1258
        %v1274 = vpack.c.b16 %v1271, %v1270
        %v1275 = vpack.c.b16 %v1273, %v1272
        %vm1278 = vcmask 261120
        %v1280 = vsel %vm1278, %v1239, 0
        %v1283 = vsel %vm1278, %v1240, 0
        %v1286 = vsel %vm1278, %v1241, 0
        %v1289 = vsel %vm1278, %v1242, 0
        %v1292 = vsel %vm1278, %v1243, 0
        %v1295 = vsel %vm1278, %v1244, 0
        %v1298 = vsel %vm1278, %v1245, 0
        %v1301 = vsel %vm1278, %v1246, 0
        %v1304 = vsel %vm1278, %v1247, 0
        %v1307 = vsel %vm1278, %v1248, 0
        %v1310 = vsel %vm1278, %v1249, 0
        %v1313 = vsel %vm1278, %v1250, 0
        %v1316 = vsel %vm1278, %v1251, 0
        %v1319 = vsel %vm1278, %v1252, 0
        %v1322 = vsel %vm1278, %v1253, 0
        %v1325 = vsel %vm1278, %v1254, 0
        %1327 = vmatprep.subr.bf16.mxu0 0
        %1328 = vmatpush1.bf16.msra.mxu0 %v1274
        %1329 = vmatprep.subr.bf16.mxu0 0
        %1330 = vmatpush1.bf16.msra.mxu0 %v1275
        %1331 = vmatprep.subr.bf16.mxu0 0
        %1332 = vmatpush1.bf16.msra.mxu0 0
        %1333 = vmatprep.subr.bf16.mxu0 0
        %1334 = vmatpush1.bf16.msra.mxu0 0
        %1335 = vmatprep.subr.bf16.mxu0 0
        %1336 = vmatpush1.bf16.msra.mxu0 0
        %1337 = vmatprep.subr.bf16.mxu0 0
        %1338 = vmatpush1.bf16.msra.mxu0 0
        %1339 = vmatprep.subr.bf16.mxu0 0
        %1340 = vmatpush1.bf16.msra.mxu0 0
        %1341 = vmatprep.subr.bf16.mxu0 0
        %1342 = vmatpush1.bf16.msra.mxu0 0
        %1343 = vmatprep.subr.bf16.mxu0 0
        %1344 = vmatpush1.bf16.msra.mxu0 0
        %1345 = vmatprep.subr.bf16.mxu0 0
        %1346 = vmatpush1.bf16.msra.mxu0 0
        %1347 = vmatprep.subr.bf16.mxu0 0
        %1348 = vmatpush1.bf16.msra.mxu0 0
        %1349 = vmatprep.subr.bf16.mxu0 0
        %1350 = vmatpush1.bf16.msra.mxu0 0
        %1351 = vmatprep.subr.bf16.mxu0 0
        %1352 = vmatpush1.bf16.msra.mxu0 0
        %1353 = vmatprep.subr.bf16.mxu0 0
        %1354 = vmatpush1.bf16.msra.mxu0 0
        %1355 = vmatprep.subr.bf16.mxu0 0
        %1356 = vmatpush1.bf16.msra.mxu0 0
        %1357 = vmatprep.subr.bf16.mxu0 0
        %1358 = vmatpush1.bf16.msra.mxu0 0
        %1359 = vmatprep.mubr.bf16.mxu0 0
        %1360 = vmatmul.mubr.bf16.gmra.mrb[0].mxu0 %v1280
        %v1361 = vpop.f32.mrb[0].mxu0
        %v1362 = vadd.f32 %v1264, %v1361
        %v1363 = vpop.f32.mrb[0].mxu0
        %v1364 = vpop.f32.mrb[0].mxu0
        %v1365 = vadd.f32 %v1264, %v1364
        %v1366 = vpop.f32.mrb[0].mxu0
        %1367 = vmatprep.mubr.bf16.mxu0 0
        %1368 = vmatmul.mubr.bf16.gmra.mrb[0].mxu0 %v1283
        %v1369 = vpop.f32.mrb[0].mxu0
        %v1370 = vadd.f32 %v1264, %v1369
        %v1371 = vpop.f32.mrb[0].mxu0
        %v1372 = vpop.f32.mrb[0].mxu0
        %v1373 = vadd.f32 %v1264, %v1372
        %v1374 = vpop.f32.mrb[0].mxu0
        %1375 = vmatprep.mubr.bf16.mxu0 0
        %1376 = vmatmul.mubr.bf16.gmra.mrb[0].mxu0 %v1286
        %v1377 = vpop.f32.mrb[0].mxu0
        %v1378 = vadd.f32 %v1264, %v1377
        %v1379 = vpop.f32.mrb[0].mxu0
        %v1380 = vpop.f32.mrb[0].mxu0
        %v1381 = vadd.f32 %v1264, %v1380
        %v1382 = vpop.f32.mrb[0].mxu0
        %1383 = vmatprep.mubr.bf16.mxu0 0
        %1384 = vmatmul.mubr.bf16.gmra.mrb[0].mxu0 %v1289
        %v1385 = vpop.f32.mrb[0].mxu0
        %v1386 = vadd.f32 %v1264, %v1385
        %v1387 = vpop.f32.mrb[0].mxu0
        %v1388 = vpop.f32.mrb[0].mxu0
        %v1389 = vadd.f32 %v1264, %v1388
        %v1390 = vpop.f32.mrb[0].mxu0
        %1391 = vmatprep.mubr.bf16.mxu0 0
        %1392 = vmatmul.mubr.bf16.gmra.mrb[0].mxu0 %v1292
        %v1393 = vpop.f32.mrb[0].mxu0
        %v1394 = vadd.f32 %v1264, %v1393
        %v1395 = vpop.f32.mrb[0].mxu0
        %v1396 = vpop.f32.mrb[0].mxu0
        %v1397 = vadd.f32 %v1264, %v1396
        %v1398 = vpop.f32.mrb[0].mxu0
        %1399 = vmatprep.mubr.bf16.mxu0 0
        %1400 = vmatmul.mubr.bf16.gmra.mrb[0].mxu0 %v1295
        %v1401 = vpop.f32.mrb[0].mxu0
        %v1402 = vadd.f32 %v1264, %v1401
        %v1403 = vpop.f32.mrb[0].mxu0
        %v1404 = vpop.f32.mrb[0].mxu0
        %v1405 = vadd.f32 %v1264, %v1404
        %v1406 = vpop.f32.mrb[0].mxu0
        %1407 = vmatprep.mubr.bf16.mxu0 0
        %1408 = vmatmul.mubr.bf16.gmra.mrb[0].mxu0 %v1298
        %v1409 = vpop.f32.mrb[0].mxu0
        %v1410 = vadd.f32 %v1264, %v1409
        %v1411 = vpop.f32.mrb[0].mxu0
        %v1412 = vpop.f32.mrb[0].mxu0
        %v1413 = vadd.f32 %v1264, %v1412
        %v1414 = vpop.f32.mrb[0].mxu0
        %1415 = vmatprep.mubr.bf16.mxu0 0
        %1416 = vmatmul.mubr.bf16.gmra.mrb[0].mxu0 %v1301
        %v1417 = vpop.f32.mrb[0].mxu0
        %v1418 = vadd.f32 %v1264, %v1417
        %v1419 = vpop.f32.mrb[0].mxu0
        %v1420 = vpop.f32.mrb[0].mxu0
        %v1421 = vadd.f32 %v1264, %v1420
        %v1422 = vpop.f32.mrb[0].mxu0
        %1423 = vmatprep.mubr.bf16.mxu0 0
        %1424 = vmatmul.mubr.bf16.gmra.mrb[0].mxu0 %v1304
        %v1425 = vpop.f32.mrb[0].mxu0
        %v1426 = vadd.f32 %v1264, %v1425
        %v1427 = vpop.f32.mrb[0].mxu0
        %v1428 = vpop.f32.mrb[0].mxu0
        %v1429 = vadd.f32 %v1264, %v1428
        %v1430 = vpop.f32.mrb[0].mxu0
        %1431 = vmatprep.mubr.bf16.mxu0 0
        %1432 = vmatmul.mubr.bf16.gmra.mrb[0].mxu0 %v1307
        %v1433 = vpop.f32.mrb[0].mxu0
        %v1434 = vadd.f32 %v1264, %v1433
        %v1435 = vpop.f32.mrb[0].mxu0
        %v1436 = vpop.f32.mrb[0].mxu0
        %v1437 = vadd.f32 %v1264, %v1436
        %v1438 = vpop.f32.mrb[0].mxu0
        %1439 = vmatprep.mubr.bf16.mxu0 0
        %1440 = vmatmul.mubr.bf16.gmra.mrb[0].mxu0 %v1310
        %v1441 = vpop.f32.mrb[0].mxu0
        %v1442 = vadd.f32 %v1264, %v1441
        %v1443 = vpop.f32.mrb[0].mxu0
        %v1444 = vpop.f32.mrb[0].mxu0
        %v1445 = vadd.f32 %v1264, %v1444
        %v1446 = vpop.f32.mrb[0].mxu0
        %1447 = vmatprep.mubr.bf16.mxu0 0
        %1448 = vmatmul.mubr.bf16.gmra.mrb[0].mxu0 %v1313
        %v1449 = vpop.f32.mrb[0].mxu0
        %v1450 = vadd.f32 %v1264, %v1449
        %v1451 = vpop.f32.mrb[0].mxu0
        %v1452 = vpop.f32.mrb[0].mxu0
        %v1453 = vadd.f32 %v1264, %v1452
        %v1454 = vpop.f32.mrb[0].mxu0
        %1455 = vmatprep.mubr.bf16.mxu0 0
        %1456 = vmatmul.mubr.bf16.gmra.mrb[0].mxu0 %v1316
        %v1457 = vpop.f32.mrb[0].mxu0
        %v1458 = vadd.f32 %v1264, %v1457
        %v1459 = vpop.f32.mrb[0].mxu0
        %v1460 = vpop.f32.mrb[0].mxu0
        %v1461 = vadd.f32 %v1264, %v1460
        %v1462 = vpop.f32.mrb[0].mxu0
        %1463 = vmatprep.mubr.bf16.mxu0 0
        %1464 = vmatmul.mubr.bf16.gmra.mrb[0].mxu0 %v1319
        %v1465 = vpop.f32.mrb[0].mxu0
        %v1466 = vadd.f32 %v1264, %v1465
        %v1467 = vpop.f32.mrb[0].mxu0
        %v1468 = vpop.f32.mrb[0].mxu0
        %v1469 = vadd.f32 %v1264, %v1468
        %v1470 = vpop.f32.mrb[0].mxu0
        %1471 = vmatprep.mubr.bf16.mxu0 0
        %1472 = vmatmul.mubr.bf16.gmra.mrb[0].mxu0 %v1322
        %v1473 = vpop.f32.mrb[0].mxu0
        %v1474 = vadd.f32 %v1264, %v1473
        %v1475 = vpop.f32.mrb[0].mxu0
        %v1476 = vpop.f32.mrb[0].mxu0
        %v1477 = vadd.f32 %v1264, %v1476
        %v1478 = vpop.f32.mrb[0].mxu0
        %1479 = vmatprep.mubr.bf16.mxu0 0
        %1480 = vmatmul.mubr.bf16.gmra.mrb[0].mxu0 %v1325
        %v1481 = vpop.f32.mrb[0].mxu0
        %v1482 = vadd.f32 %v1264, %v1481
        %v1483 = vpop.f32.mrb[0].mxu0
        %v1484 = vpop.f32.mrb[0].mxu0
        %v1485 = vadd.f32 %v1264, %v1484
        %v1486 = vpop.f32.mrb[0].mxu0
        %1487 = vdwg.mxu0
        %vm1488 = vcmask 7168
        %1489 = vst.msk [vmem:[%s336] sm:$0xff] %vm1488, %v1362
        %1490 = vst.msk [vmem:[%s336 + $0x8] sm:$0xff] %vm1488, %v1365
        %1491 = vst.msk [vmem:[%s336 + $0x10] sm:$0xff] %vm1488, %v1370
        %1492 = vst.msk [vmem:[%s336 + $0x18] sm:$0xff] %vm1488, %v1373
        %1493 = vst.msk [vmem:[%s336 + $0x20] sm:$0xff] %vm1488, %v1378
        %1494 = vst.msk [vmem:[%s336 + $0x28] sm:$0xff] %vm1488, %v1381
        %1495 = vst.msk [vmem:[%s336 + $0x30] sm:$0xff] %vm1488, %v1386
        %1496 = vst.msk [vmem:[%s336 + $0x38] sm:$0xff] %vm1488, %v1389
        %1497 = vst.msk [vmem:[%s336 + $0x40] sm:$0xff] %vm1488, %v1394
        %1498 = vst.msk [vmem:[%s336 + $0x48] sm:$0xff] %vm1488, %v1397
        %1499 = vst.msk [vmem:[%s336 + $0x50] sm:$0xff] %vm1488, %v1402
        %1500 = vst.msk [vmem:[%s336 + $0x58] sm:$0xff] %vm1488, %v1405
        %1501 = vst.msk [vmem:[%s336 + $0x60] sm:$0xff] %vm1488, %v1410
        %1502 = vst.msk [vmem:[%s336 + $0x68] sm:$0xff] %vm1488, %v1413
        %1503 = vst.msk [vmem:[%s336 + $0x70] sm:$0xff] %vm1488, %v1418
        %1504 = vst.msk [vmem:[%s336 + $0x78] sm:$0xff] %vm1488, %v1421
        %1505 = vst.msk [vmem:[%s336 + $0x80] sm:$0xff] %vm1488, %v1426
        %1506 = vst.msk [vmem:[%s336 + $0x88] sm:$0xff] %vm1488, %v1429
        %1507 = vst.msk [vmem:[%s336 + $0x90] sm:$0xff] %vm1488, %v1434
        %1508 = vst.msk [vmem:[%s336 + $0x98] sm:$0xff] %vm1488, %v1437
        %1509 = vst.msk [vmem:[%s336 + $0xa0] sm:$0xff] %vm1488, %v1442
        %1510 = vst.msk [vmem:[%s336 + $0xa8] sm:$0xff] %vm1488, %v1445
        %1511 = vst.msk [vmem:[%s336 + $0xb0] sm:$0xff] %vm1488, %v1450
        %1512 = vst.msk [vmem:[%s336 + $0xb8] sm:$0xff] %vm1488, %v1453
        %1513 = vst.msk [vmem:[%s336 + $0xc0] sm:$0xff] %vm1488, %v1458
        %1514 = vst.msk [vmem:[%s336 + $0xc8] sm:$0xff] %vm1488, %v1461
        %1515 = vst.msk [vmem:[%s336 + $0xd0] sm:$0xff] %vm1488, %v1466
        %1516 = vst.msk [vmem:[%s336 + $0xd8] sm:$0xff] %vm1488, %v1469
        %1517 = vst.msk [vmem:[%s336 + $0xe0] sm:$0xff] %vm1488, %v1474
        %1518 = vst.msk [vmem:[%s336 + $0xe8] sm:$0xff] %vm1488, %v1477
        %1519 = vst.msk [vmem:[%s336 + $0xf0] sm:$0xff] %vm1488, %v1482
        %1520 = vst.msk [vmem:[%s336 + $0xf8] sm:$0xff] %vm1488, %v1485
        %s1521 = sand.u32 %s224, 1
        %s1522 = sand.u32 %s224, 1
        %s1523 = smul.addr %s1522, 256
        %s1524 = scalar_lea.vmem [#allocation3], %s1523
        // Predicated region
        $region57: #{tpu_custom_call.1} parent=55 // pred_check
          %p1525 = pneg %p234
        $region58: #{tpu_custom_call.1} parent=55 // pred_check_branch
          %1527 = sbr.rel (%p1525) target = $region60
        $region59: #{tpu_custom_call.1} parent=55 // pred_region
          %s1528 = smul.u32 32, %s22
          %s1529 = ssub.s32 48, %s1528
          %p1530 = scmp.lt.s32.totalorder %s1529, 32
          %s1531 = scalar_select %p1530, %s1529, 32
          %s1532 = smul.u32 128, %s1531
          %p1533 = scmp.ne.s32.totalorder 0, %s1532
          %s1534 = smul.addr %s1528, 8
          %s1535 = scalar_lea.vmem %s9, %s1534
          // Predicated region
          $region61: #{tpu_custom_call.1} parent=59 // pred_check
            %p1536 = pneg %p1533
          $region62: #{tpu_custom_call.1} parent=59 // pred_check_branch
            %1538 = sbr.rel (%p1536) target = $region64
          $region63: #{tpu_custom_call.1} parent=59 // pred_region
            // Predicated region
            $region65: #{tpu_custom_call.1} parent=63 // pred_check
              _
            $region66: #{tpu_custom_call.1} parent=63 // pred_check_branch
              %1540 = sbr.rel (0) target = $region68
            $region67: #{tpu_custom_call.1} parent=63 // pred_region
              // Predicated region
              $region87: #{tpu_custom_call.1} parent=67 // pred_check
                _
              $region88: #{tpu_custom_call.1} parent=67 // pred_check_branch
                %1651 = sbr.rel (0) target = $region90
              $region89: #{tpu_custom_call.1} parent=67 // pred_region
                %s1652 = sshrl.u32 %s1531, 5
                // While loop
                $region91: #{tpu_custom_call.1} parent=89 // loop_pre_header
                  _
                $region92: #{tpu_custom_call.1} parent=89 // loop_header
                  %s1654 = sphi 0, %s1656
                  %p1655 = scmp.ge.s32.totalorder %s1654, %s1652
                  %s1659 = sphi 0, %s1728
                  %s1660 = sphi %s1524, %s1731
                  %s1661 = sphi %s1535, %s1732
                $region93: #{tpu_custom_call.1} parent=89 // loop_header_branch
                  %1658 = sbr.rel (%p1655) target = $region97
                $region94: #{tpu_custom_call.1} parent=89 // loop_body
                  %v1662 = vld [vmem:[%s1660] sm:$0xff]
                  %1663 = vst [vmem:[%s1661] sm:$0xff] %v1662
                  %v1664 = vld [vmem:[%s1660 + $0x8] sm:$0xff]
                  %1665 = vst [vmem:[%s1661 + $0x8] sm:$0xff] %v1664
                  %v1666 = vld [vmem:[%s1660 + $0x10] sm:$0xff]
                  %1667 = vst [vmem:[%s1661 + $0x10] sm:$0xff] %v1666
                  %v1668 = vld [vmem:[%s1660 + $0x18] sm:$0xff]
                  %1669 = vst [vmem:[%s1661 + $0x18] sm:$0xff] %v1668
                  %v1670 = vld [vmem:[%s1660 + $0x20] sm:$0xff]
                  %1671 = vst [vmem:[%s1661 + $0x20] sm:$0xff] %v1670
                  %v1672 = vld [vmem:[%s1660 + $0x28] sm:$0xff]
                  %1673 = vst [vmem:[%s1661 + $0x28] sm:$0xff] %v1672
                  %v1674 = vld [vmem:[%s1660 + $0x30] sm:$0xff]
                  %1675 = vst [vmem:[%s1661 + $0x30] sm:$0xff] %v1674
                  %v1676 = vld [vmem:[%s1660 + $0x38] sm:$0xff]
                  %1677 = vst [vmem:[%s1661 + $0x38] sm:$0xff] %v1676
                  %v1678 = vld [vmem:[%s1660 + $0x40] sm:$0xff]
                  %1679 = vst [vmem:[%s1661 + $0x40] sm:$0xff] %v1678
                  %v1680 = vld [vmem:[%s1660 + $0x48] sm:$0xff]
                  %1681 = vst [vmem:[%s1661 + $0x48] sm:$0xff] %v1680
                  %v1682 = vld [vmem:[%s1660 + $0x50] sm:$0xff]
                  %1683 = vst [vmem:[%s1661 + $0x50] sm:$0xff] %v1682
                  %v1684 = vld [vmem:[%s1660 + $0x58] sm:$0xff]
                  %1685 = vst [vmem:[%s1661 + $0x58] sm:$0xff] %v1684
                  %v1686 = vld [vmem:[%s1660 + $0x60] sm:$0xff]
                  %1687 = vst [vmem:[%s1661 + $0x60] sm:$0xff] %v1686
                  %v1688 = vld [vmem:[%s1660 + $0x68] sm:$0xff]
                  %1689 = vst [vmem:[%s1661 + $0x68] sm:$0xff] %v1688
                  %v1690 = vld [vmem:[%s1660 + $0x70] sm:$0xff]
                  %1691 = vst [vmem:[%s1661 + $0x70] sm:$0xff] %v1690
                  %v1692 = vld [vmem:[%s1660 + $0x78] sm:$0xff]
                  %1693 = vst [vmem:[%s1661 + $0x78] sm:$0xff] %v1692
                  %v1694 = vld [vmem:[%s1660 + $0x80] sm:$0xff]
                  %1695 = vst [vmem:[%s1661 + $0x80] sm:$0xff] %v1694
                  %v1696 = vld [vmem:[%s1660 + $0x88] sm:$0xff]
                  %1697 = vst [vmem:[%s1661 + $0x88] sm:$0xff] %v1696
                  %v1698 = vld [vmem:[%s1660 + $0x90] sm:$0xff]
                  %1699 = vst [vmem:[%s1661 + $0x90] sm:$0xff] %v1698
                  %v1700 = vld [vmem:[%s1660 + $0x98] sm:$0xff]
                  %1701 = vst [vmem:[%s1661 + $0x98] sm:$0xff] %v1700
                  %v1702 = vld [vmem:[%s1660 + $0xa0] sm:$0xff]
                  %1703 = vst [vmem:[%s1661 + $0xa0] sm:$0xff] %v1702
                  %v1704 = vld [vmem:[%s1660 + $0xa8] sm:$0xff]
                  %1705 = vst [vmem:[%s1661 + $0xa8] sm:$0xff] %v1704
                  %v1706 = vld [vmem:[%s1660 + $0xb0] sm:$0xff]
                  %1707 = vst [vmem:[%s1661 + $0xb0] sm:$0xff] %v1706
                  %v1708 = vld [vmem:[%s1660 + $0xb8] sm:$0xff]
                  %1709 = vst [vmem:[%s1661 + $0xb8] sm:$0xff] %v1708
                  %v1710 = vld [vmem:[%s1660 + $0xc0] sm:$0xff]
                  %1711 = vst [vmem:[%s1661 + $0xc0] sm:$0xff] %v1710
                  %v1712 = vld [vmem:[%s1660 + $0xc8] sm:$0xff]
                  %1713 = vst [vmem:[%s1661 + $0xc8] sm:$0xff] %v1712
                  %v1714 = vld [vmem:[%s1660 + $0xd0] sm:$0xff]
                  %1715 = vst [vmem:[%s1661 + $0xd0] sm:$0xff] %v1714
                  %v1716 = vld [vmem:[%s1660 + $0xd8] sm:$0xff]
                  %1717 = vst [vmem:[%s1661 + $0xd8] sm:$0xff] %v1716
                  %v1718 = vld [vmem:[%s1660 + $0xe0] sm:$0xff]
                  %1719 = vst [vmem:[%s1661 + $0xe0] sm:$0xff] %v1718
                  %v1720 = vld [vmem:[%s1660 + $0xe8] sm:$0xff]
                  %1721 = vst [vmem:[%s1661 + $0xe8] sm:$0xff] %v1720
                  %v1722 = vld [vmem:[%s1660 + $0xf0] sm:$0xff]
                  %1723 = vst [vmem:[%s1661 + $0xf0] sm:$0xff] %v1722
                  %v1724 = vld [vmem:[%s1660 + $0xf8] sm:$0xff]
                  %1725 = vst [vmem:[%s1661 + $0xf8] sm:$0xff] %v1724
                  %s1726 = sadd.s32 1, %s1659
                  %p1727 = scmp.ge.s32.totalorder %s1726, %s1652
                  %s1728 = scalar_select %p1727, 0, %s1726
                  %s1729 = smul.u32 %s1728, 256
                  %s1730 = smul.u32 %s1728, 256
                  %s1731 = scalar_lea.vmem %s1524, %s1729 [#allocation3]
                  %s1732 = scalar_lea.vmem %s1535, %s1730
                $region95: #{tpu_custom_call.1} parent=89 // loop_footer
                  %s1656 = sadd.s32 %s1654, 1
                $region96: #{tpu_custom_call.1} parent=89 // loop_footer_branch
                  %1653 = sbr.rel target = $region92
                $region97: #{tpu_custom_call.1} parent=89 // loop_exit
                  _
                %s1733 = sshrl.u32 %s1531, 5
                %s1734 = sand.u32 %s1531, 31
                %s1735 = smul.u32 %s1733, 32
                %s1736 = smul.u32 8, %s1735
                %s1737 = scalar_lea.vmem %s1524, %s1736 [#allocation3]
                %s1738 = smul.u32 8, %s1735
                %s1739 = scalar_lea.vmem %s1535, %s1738
                // While loop
                $region98: #{tpu_custom_call.1} parent=89 // loop_pre_header
                  _
                $region99: #{tpu_custom_call.1} parent=89 // loop_header
                  %s1741 = sphi 0, %s1743
                  %p1742 = scmp.ge.s32.totalorder %s1741, %s1734
                  %s1746 = sphi 0, %s1753
                  %s1747 = sphi %s1737, %s1756
                  %s1748 = sphi %s1739, %s1757
                $region100: #{tpu_custom_call.1} parent=89 // loop_header_branch
                  %1745 = sbr.rel (%p1742) target = $region104
                $region101: #{tpu_custom_call.1} parent=89 // loop_body
                  %v1749 = vld [vmem:[%s1747] sm:$0xff]
                  %1750 = vst [vmem:[%s1748] sm:$0xff] %v1749
                  %s1751 = sadd.s32 1, %s1746
                  %p1752 = scmp.ge.s32.totalorder %s1751, %s1734
                  %s1753 = scalar_select %p1752, 0, %s1751
                  %s1754 = smul.u32 %s1753, 8
                  %s1755 = smul.u32 %s1753, 8
                  %s1756 = scalar_lea.vmem %s1737, %s1754 [#allocation3]
                  %s1757 = scalar_lea.vmem %s1739, %s1755
                $region102: #{tpu_custom_call.1} parent=89 // loop_footer
                  %s1743 = sadd.s32 %s1741, 1
                $region103: #{tpu_custom_call.1} parent=89 // loop_footer_branch
                  %1740 = sbr.rel target = $region99
                $region104: #{tpu_custom_call.1} parent=89 // loop_exit
                  _
              $region90: #{tpu_custom_call.1} parent=67 // pred_fallthru
                _
              // Predicated region
              $region105: #{tpu_custom_call.1} parent=67 // pred_check
                _
              $region106: #{tpu_custom_call.1} parent=67 // pred_check_branch
                %1759 = sbr.rel target = $region108
              $region107: #{tpu_custom_call.1} parent=67 // pred_region
                _
              $region108: #{tpu_custom_call.1} parent=67 // pred_fallthru
                _
            $region68: #{tpu_custom_call.1} parent=63 // pred_fallthru
              _
            // Predicated region
            $region69: #{tpu_custom_call.1} parent=63 // pred_check
              _
            $region70: #{tpu_custom_call.1} parent=63 // pred_check_branch
              %1542 = sbr.rel target = $region72
            $region71: #{tpu_custom_call.1} parent=63 // pred_region
              %s1544 = sshrl.u32 %s1531, 5
              // While loop
              $region73: #{tpu_custom_call.1} parent=71 // loop_pre_header
                _
              $region74: #{tpu_custom_call.1} parent=71 // loop_header
                %s1546 = sphi 0, %s1548
                %p1547 = scmp.ge.s32.totalorder %s1546, %s1544
                %s1551 = sphi 0, %s1620
                %s1552 = sphi %s1524, %s1623
                %s1553 = sphi %s1535, %s1624
              $region75: #{tpu_custom_call.1} parent=71 // loop_header_branch
                %1550 = sbr.rel (%p1547) target = $region79
              $region76: #{tpu_custom_call.1} parent=71 // loop_body
                %v1554 = vld [vmem:[%s1552] sm:$0xff]
                %1555 = vst [vmem:[%s1553] sm:$0xff] %v1554
                %v1556 = vld [vmem:[%s1552 + $0x8] sm:$0xff]
                %1557 = vst [vmem:[%s1553 + $0x8] sm:$0xff] %v1556
                %v1558 = vld [vmem:[%s1552 + $0x10] sm:$0xff]
                %1559 = vst [vmem:[%s1553 + $0x10] sm:$0xff] %v1558
                %v1560 = vld [vmem:[%s1552 + $0x18] sm:$0xff]
                %1561 = vst [vmem:[%s1553 + $0x18] sm:$0xff] %v1560
                %v1562 = vld [vmem:[%s1552 + $0x20] sm:$0xff]
                %1563 = vst [vmem:[%s1553 + $0x20] sm:$0xff] %v1562
                %v1564 = vld [vmem:[%s1552 + $0x28] sm:$0xff]
                %1565 = vst [vmem:[%s1553 + $0x28] sm:$0xff] %v1564
                %v1566 = vld [vmem:[%s1552 + $0x30] sm:$0xff]
                %1567 = vst [vmem:[%s1553 + $0x30] sm:$0xff] %v1566
                %v1568 = vld [vmem:[%s1552 + $0x38] sm:$0xff]
                %1569 = vst [vmem:[%s1553 + $0x38] sm:$0xff] %v1568
                %v1570 = vld [vmem:[%s1552 + $0x40] sm:$0xff]
                %1571 = vst [vmem:[%s1553 + $0x40] sm:$0xff] %v1570
                %v1572 = vld [vmem:[%s1552 + $0x48] sm:$0xff]
                %1573 = vst [vmem:[%s1553 + $0x48] sm:$0xff] %v1572
                %v1574 = vld [vmem:[%s1552 + $0x50] sm:$0xff]
                %1575 = vst [vmem:[%s1553 + $0x50] sm:$0xff] %v1574
                %v1576 = vld [vmem:[%s1552 + $0x58] sm:$0xff]
                %1577 = vst [vmem:[%s1553 + $0x58] sm:$0xff] %v1576
                %v1578 = vld [vmem:[%s1552 + $0x60] sm:$0xff]
                %1579 = vst [vmem:[%s1553 + $0x60] sm:$0xff] %v1578
                %v1580 = vld [vmem:[%s1552 + $0x68] sm:$0xff]
                %1581 = vst [vmem:[%s1553 + $0x68] sm:$0xff] %v1580
                %v1582 = vld [vmem:[%s1552 + $0x70] sm:$0xff]
                %1583 = vst [vmem:[%s1553 + $0x70] sm:$0xff] %v1582
                %v1584 = vld [vmem:[%s1552 + $0x78] sm:$0xff]
                %1585 = vst [vmem:[%s1553 + $0x78] sm:$0xff] %v1584
                %v1586 = vld [vmem:[%s1552 + $0x80] sm:$0xff]
                %1587 = vst [vmem:[%s1553 + $0x80] sm:$0xff] %v1586
                %v1588 = vld [vmem:[%s1552 + $0x88] sm:$0xff]
                %1589 = vst [vmem:[%s1553 + $0x88] sm:$0xff] %v1588
                %v1590 = vld [vmem:[%s1552 + $0x90] sm:$0xff]
                %1591 = vst [vmem:[%s1553 + $0x90] sm:$0xff] %v1590
                %v1592 = vld [vmem:[%s1552 + $0x98] sm:$0xff]
                %1593 = vst [vmem:[%s1553 + $0x98] sm:$0xff] %v1592
                %v1594 = vld [vmem:[%s1552 + $0xa0] sm:$0xff]
                %1595 = vst [vmem:[%s1553 + $0xa0] sm:$0xff] %v1594
                %v1596 = vld [vmem:[%s1552 + $0xa8] sm:$0xff]
                %1597 = vst [vmem:[%s1553 + $0xa8] sm:$0xff] %v1596
                %v1598 = vld [vmem:[%s1552 + $0xb0] sm:$0xff]
                %1599 = vst [vmem:[%s1553 + $0xb0] sm:$0xff] %v1598
                %v1600 = vld [vmem:[%s1552 + $0xb8] sm:$0xff]
                %1601 = vst [vmem:[%s1553 + $0xb8] sm:$0xff] %v1600
                %v1602 = vld [vmem:[%s1552 + $0xc0] sm:$0xff]
                %1603 = vst [vmem:[%s1553 + $0xc0] sm:$0xff] %v1602
                %v1604 = vld [vmem:[%s1552 + $0xc8] sm:$0xff]
                %1605 = vst [vmem:[%s1553 + $0xc8] sm:$0xff] %v1604
                %v1606 = vld [vmem:[%s1552 + $0xd0] sm:$0xff]
                %1607 = vst [vmem:[%s1553 + $0xd0] sm:$0xff] %v1606
                %v1608 = vld [vmem:[%s1552 + $0xd8] sm:$0xff]
                %1609 = vst [vmem:[%s1553 + $0xd8] sm:$0xff] %v1608
                %v1610 = vld [vmem:[%s1552 + $0xe0] sm:$0xff]
                %1611 = vst [vmem:[%s1553 + $0xe0] sm:$0xff] %v1610
                %v1612 = vld [vmem:[%s1552 + $0xe8] sm:$0xff]
                %1613 = vst [vmem:[%s1553 + $0xe8] sm:$0xff] %v1612
                %v1614 = vld [vmem:[%s1552 + $0xf0] sm:$0xff]
                %1615 = vst [vmem:[%s1553 + $0xf0] sm:$0xff] %v1614
                %v1616 = vld [vmem:[%s1552 + $0xf8] sm:$0xff]
                %1617 = vst [vmem:[%s1553 + $0xf8] sm:$0xff] %v1616
                %s1618 = sadd.s32 1, %s1551
                %p1619 = scmp.ge.s32.totalorder %s1618, %s1544
                %s1620 = scalar_select %p1619, 0, %s1618
                %s1621 = smul.u32 %s1620, 256
                %s1622 = smul.u32 %s1620, 256
                %s1623 = scalar_lea.vmem %s1524, %s1621 [#allocation3]
                %s1624 = scalar_lea.vmem %s1535, %s1622
              $region77: #{tpu_custom_call.1} parent=71 // loop_footer
                %s1548 = sadd.s32 %s1546, 1
              $region78: #{tpu_custom_call.1} parent=71 // loop_footer_branch
                %1545 = sbr.rel target = $region74
              $region79: #{tpu_custom_call.1} parent=71 // loop_exit
                _
              %s1625 = sshrl.u32 %s1531, 5
              %s1626 = sand.u32 %s1531, 31
              %s1627 = smul.u32 %s1625, 32
              %s1628 = smul.u32 8, %s1627
              %s1629 = scalar_lea.vmem %s1524, %s1628 [#allocation3]
              %s1630 = smul.u32 8, %s1627
              %s1631 = scalar_lea.vmem %s1535, %s1630
              // While loop
              $region80: #{tpu_custom_call.1} parent=71 // loop_pre_header
                _
              $region81: #{tpu_custom_call.1} parent=71 // loop_header
                %s1633 = sphi 0, %s1635
                %p1634 = scmp.ge.s32.totalorder %s1633, %s1626
                %s1638 = sphi 0, %s1645
                %s1639 = sphi %s1629, %s1648
                %s1640 = sphi %s1631, %s1649
              $region82: #{tpu_custom_call.1} parent=71 // loop_header_branch
                %1637 = sbr.rel (%p1634) target = $region86
              $region83: #{tpu_custom_call.1} parent=71 // loop_body
                %v1641 = vld [vmem:[%s1639] sm:$0xff]
                %1642 = vst [vmem:[%s1640] sm:$0xff] %v1641
                %s1643 = sadd.s32 1, %s1638
                %p1644 = scmp.ge.s32.totalorder %s1643, %s1626
                %s1645 = scalar_select %p1644, 0, %s1643
                %s1646 = smul.u32 %s1645, 8
                %s1647 = smul.u32 %s1645, 8
                %s1648 = scalar_lea.vmem %s1629, %s1646 [#allocation3]
                %s1649 = scalar_lea.vmem %s1631, %s1647
              $region84: #{tpu_custom_call.1} parent=71 // loop_footer
                %s1635 = sadd.s32 %s1633, 1
              $region85: #{tpu_custom_call.1} parent=71 // loop_footer_branch
                %1632 = sbr.rel target = $region81
              $region86: #{tpu_custom_call.1} parent=71 // loop_exit
                _
            $region72: #{tpu_custom_call.1} parent=63 // pred_fallthru
              _
          $region64: #{tpu_custom_call.1} parent=59 // pred_fallthru
            _
          %1760 = vnop
        $region60: #{tpu_custom_call.1} parent=55 // pred_fallthru
          _
      $region56: #{tpu_custom_call.1} parent=5 // pred_fallthru
        _
      %p1761 = scmp.le.s32.totalorder 2, %s17
      // Predicated region
      $region109: #{tpu_custom_call.1} parent=5 // pred_check
        %p1762 = pneg %p1761
      $region110: #{tpu_custom_call.1} parent=5 // pred_check_branch
        %1764 = sbr.rel (%p1762) target = $region112
      $region111: #{tpu_custom_call.1} parent=5 // pred_region
        %s1765 = ssub.s32 %s17, 2
        // Predicated region
        $region113: #{tpu_custom_call.1} parent=111 // pred_check
          %p1766 = pneg %p240
        $region114: #{tpu_custom_call.1} parent=111 // pred_check_branch
          %1768 = sbr.rel (%p1766) target = $region116
        $region115: #{tpu_custom_call.1} parent=111 // pred_region
          %s1769 = sand.u32 %s225, 1
          %s1770 = sand.u32 %s225, 1
          %s1771 = smul.addr %s1770, 256
          %s1772 = scalar_lea.vmem [#allocation3], %s1771
        $region116: #{tpu_custom_call.1} parent=111 // pred_fallthru
          _
      $region112: #{tpu_custom_call.1} parent=5 // pred_fallthru
        _
    $region6: #{tpu_custom_call.1} parent=1 // loop_footer
      %s21 = sadd.s32 1, %s17
    $region7: #{tpu_custom_call.1} parent=1 // loop_footer_branch
      %16 = sbr.rel target = $region3
    $region8: #{tpu_custom_call.1} parent=1 // loop_exit
      _

</llo_original>
